<compile_context>
chip_gen: v7x
topology: tpu7x:2x2x1
jax: 0.10.0
libtpu: 0.0.40
codegen_flags: <defaults>
</compile_context>

<pallas_src>
import functools

import jax
import jax.numpy as jnp
from jax.experimental import pallas as pl
from jax.experimental.pallas import tpu as pltpu

IMAGE_DIM = 512
TEXT_DIM = 512
HIDDEN = 256
CLS_HIDDEN = 128
NUM_CLASSES = 80
OUT_PAD = 128          # lane-dense padded output width (>= NUM_CLASSES)
LN_EPS = 1e-5

# Row indices inside the packed (16, HIDDEN) f32 bias/gamma/beta table.
_R_BI, _R_GI, _R_BGI = 0, 1, 2        # image_proj
_R_BT, _R_GT, _R_BGT = 3, 4, 5        # text_proj
_R_BF, _R_GF, _R_BGF = 6, 7, 8        # fusion
_R_BC1, _R_GC1, _R_BGC1 = 9, 10, 11   # classifier hidden
_R_BC2 = 12                           # classifier head bias (padded to 128)
_VEC_ROWS = 16


def _round_up(x, m):
    return (x + m - 1) // m * m


def _ln_relu_bf16(x, gamma, beta):
    """PyTorch LayerNorm (biased variance, eps inside rsqrt) + ReLU.

    Statistics + normalization in f32; affine + ReLU in bf16 (cheaper on the
    bf16-capable VPUs of v6e/v7x, v5e simply upcasts).  One-pass variance
    (E[x^2] - E[x]^2) is used deliberately: post-linear activations here have
    |mean| ~ std so cancellation is benign, and the >=0 clamp guards rsqrt.
    Returns bf16, ready to feed the next MXU matmul.
    """
    d = x.shape[-1]
    s1 = jnp.sum(x, axis=-1, keepdims=True)
    s2 = jnp.sum(x * x, axis=-1, keepdims=True)
    mu = s1 * (1.0 / d)
    var = jnp.maximum(s2 * (1.0 / d) - mu * mu, 0.0)
    r = jax.lax.rsqrt(var + LN_EPS)
    xhat = ((x - mu) * r).astype(jnp.bfloat16)
    y = xhat * gamma.astype(jnp.bfloat16) + beta.astype(jnp.bfloat16)
    return jnp.maximum(y, 0)


def _mm_classifier_kernel(
    img_ref, txt_ref,
    wi_ref, wt_ref, wfi_ref, wft_ref, wc1_ref, wc2_ref,
    vec_ref,                                  # packed biases / LN gammas / betas
    out_ref,
):
    # Inputs arrive in their native f32; a single VPU cast feeds the bf16 MXU path.
    img = img_ref[...].astype(jnp.bfloat16)   # (tb, 512)
    txt = txt_ref[...].astype(jnp.bfloat16)   # (tb, 512)
    v = vec_ref                               # (16, 256) f32, static row slices

    # image_proj: Linear -> LayerNorm -> ReLU -> Dropout(eval no-op)
    img_h = (jnp.dot(img, wi_ref[...], preferred_element_type=jnp.float32)
             + v[_R_BI:_R_BI + 1, :])
    img_h = _ln_relu_bf16(img_h, v[_R_GI:_R_GI + 1, :], v[_R_BGI:_R_BGI + 1, :])

    # text_proj
    txt_h = (jnp.dot(txt, wt_ref[...], preferred_element_type=jnp.float32)
             + v[_R_BT:_R_BT + 1, :])
    txt_h = _ln_relu_bf16(txt_h, v[_R_GT:_R_GT + 1, :], v[_R_BGT:_R_BGT + 1, :])

    # fusion on concat([img_h, txt_h]); weight pre-split into two (256,256)
    # halves so no concat / in-kernel slice is materialized.
    fused = (
        jnp.dot(img_h, wfi_ref[...], preferred_element_type=jnp.float32)
        + jnp.dot(txt_h, wft_ref[...], preferred_element_type=jnp.float32)
        + v[_R_BF:_R_BF + 1, :]
    )
    fused = _ln_relu_bf16(fused, v[_R_GF:_R_GF + 1, :], v[_R_BGF:_R_BGF + 1, :])

    # classifier: Linear(256,128) -> LN -> ReLU -> Dropout -> Linear(128, 80 pad 128)
    hid = (jnp.dot(fused, wc1_ref[...], preferred_element_type=jnp.float32)
           + v[_R_BC1:_R_BC1 + 1, :CLS_HIDDEN])
    hid = _ln_relu_bf16(hid, v[_R_GC1:_R_GC1 + 1, :CLS_HIDDEN],
                        v[_R_BGC1:_R_BGC1 + 1, :CLS_HIDDEN])

    logits = (jnp.dot(hid, wc2_ref[...], preferred_element_type=jnp.float32)
              + v[_R_BC2:_R_BC2 + 1, :OUT_PAD])
    out_ref[...] = logits.astype(out_ref.dtype)

    # TODO(synk): training-mode dropout (pltpu.prng_random_bits masking) is not
    # implemented; eval-mode dropout is the identity.


def prepare_params(p):
    """One-time (model-load) weight prep.  Call ONCE and reuse the result —
    it must NOT be re-run inside the per-step forward (that was the single
    biggest source of wasted HBM traffic in the previous version)."""
    wf = p["wf"]
    wc2_pad = (jnp.zeros((CLS_HIDDEN, OUT_PAD), jnp.float32)
               .at[:, :NUM_CLASSES].set(p["wc2"]))

    def row(vec):
        v = jnp.asarray(vec, jnp.float32).reshape(-1)
        return jnp.zeros((HIDDEN,), jnp.float32).at[: v.shape[0]].set(v)

    vecs = jnp.stack(
        [
            row(p["bi"]), row(p["gi"]), row(p["bgi"]),
            row(p["bt"]), row(p["gt"]), row(p["bgt"]),
            row(p["bf"]), row(p["gf"]), row(p["bgf"]),
            row(p["bc1"]), row(p["gc1"]), row(p["bgc1"]),
            row(p["bc2"]),
            jnp.zeros((HIDDEN,), jnp.float32),
            jnp.zeros((HIDDEN,), jnp.float32),
            jnp.zeros((HIDDEN,), jnp.float32),
        ],
        axis=0,
    )  # (16, 256) f32

    return dict(
        wi=p["wi"].astype(jnp.bfloat16),
        wt=p["wt"].astype(jnp.bfloat16),
        wf_img=wf[:HIDDEN, :].astype(jnp.bfloat16),
        wf_txt=wf[HIDDEN:, :].astype(jnp.bfloat16),
        wc1=p["wc1"].astype(jnp.bfloat16),
        wc2=wc2_pad.astype(jnp.bfloat16),
        vecs=vecs,
    )


@functools.partial(jax.jit, static_argnames=("tile_b",))
def multimodal_classifier_forward(image, text, prepared, *, tile_b=512):
    """Forward pass.  `prepared` must come from a single prepare_params() call.

    tile_b: batch tile.  512 is a good default on v6e/v7x; 256 is a reasonable
    choice on v5e (limits f32-intermediate pressure feeding the MXU).
    """
    B = image.shape[0]

    # Batch tile: multiple of 8 sublanes, capped at tile_b.  For larger batches
    # keep >= 2 grid blocks so the "parallel" axis can shard across v7x's 2 TCs.
    tb = _round_up(min(tile_b, max(B, 8)), 8)
    if B >= 256 and pl.cdiv(B, tb) < 2:
        tb = _round_up(pl.cdiv(B, 2), 8)
    grid = (pl.cdiv(B, tb),)

    weight_args = (
        prepared["wi"], prepared["wt"],
        prepared["wf_img"], prepared["wf_txt"],
        prepared["wc1"], prepared["wc2"],
        prepared["vecs"],
    )

    # Inputs tiled over batch (ragged last block handled by Pallas; OOB rows
    # are computed per-row and never written back).  Weights use constant
    # index_maps so they stay VMEM-resident across grid steps.
    in_specs = [
        pl.BlockSpec((tb, IMAGE_DIM), lambda i: (i, 0)),
        pl.BlockSpec((tb, TEXT_DIM), lambda i: (i, 0)),
    ] + [pl.BlockSpec(w.shape, lambda i: (0, 0)) for w in weight_args]
    out_spec = pl.BlockSpec((tb, OUT_PAD), lambda i: (i, 0))

    flops = 2 * B * (
        IMAGE_DIM * HIDDEN          # image proj
        + TEXT_DIM * HIDDEN         # text proj
        + 2 * HIDDEN * HIDDEN       # fusion (two halves)
        + HIDDEN * CLS_HIDDEN       # classifier hidden
        + CLS_HIDDEN * OUT_PAD      # classifier head (padded)
    )
    weight_bytes = sum(int(w.size) * w.dtype.itemsize for w in weight_args)
    bytes_accessed = (
        B * (IMAGE_DIM + TEXT_DIM) * 4   # f32 inputs (cast to bf16 in-kernel)
        + B * OUT_PAD * 4                # f32 output
        + weight_bytes
    )

    out = pl.pallas_call(
        _mm_classifier_kernel,
        out_shape=jax.ShapeDtypeStruct((B, OUT_PAD), jnp.float32),
        grid=grid,
        in_specs=in_specs,
        out_specs=out_spec,
        compiler_params=pltpu.CompilerParams(
            dimension_semantics=("parallel",),
        ),
        cost_estimate=pl.CostEstimate(
            flops=flops, transcendentals=0, bytes_accessed=bytes_accessed
        ),
    )(image, text, *weight_args)

    return out[:, :NUM_CLASSES]


def init_params(key):
    """Deterministic synthetic parameters (shapes match the PyTorch module)."""
    ks = jax.random.split(key, 10)

    def linear(kw, in_dim, out_dim):
        # (in, out) layout = transposed PyTorch weight.
        w = jax.random.normal(kw, (in_dim, out_dim), jnp.float32) * (1.0 / jnp.sqrt(in_dim))
        b = jnp.zeros((1, out_dim), jnp.float32)
        return w, b

    def ln(dim):
        return jnp.ones((1, dim), jnp.float32), jnp.zeros((1, dim), jnp.float32)

    wi, bi = linear(ks[0], IMAGE_DIM, HIDDEN)
    gi, bgi = ln(HIDDEN)
    wt, bt = linear(ks[1], TEXT_DIM, HIDDEN)
    gt, bgt = ln(HIDDEN)
    wf, bf = linear(ks[2], 2 * HIDDEN, HIDDEN)
    gf, bgf = ln(HIDDEN)
    wc1, bc1 = linear(ks[3], HIDDEN, CLS_HIDDEN)
    gc1, bgc1 = ln(CLS_HIDDEN)
    wc2, bc2 = linear(ks[4], CLS_HIDDEN, NUM_CLASSES)

    return dict(
        wi=wi, bi=bi, gi=gi, bgi=bgi,
        wt=wt, bt=bt, gt=gt, bgt=bgt,
        wf=wf, bf=bf, gf=gf, bgf=bgf,
        wc1=wc1, bc1=bc1, gc1=gc1, bgc1=bgc1,
        wc2=wc2, bc2=bc2,
    )


def reference_forward(image, text, p):
    """Pure-JAX f32 reference matching the PyTorch module (eval mode)."""
    def lnf(x, g, b):
        mu = jnp.mean(x, axis=-1, keepdims=True)
        var = jnp.mean((x - mu) ** 2, axis=-1, keepdims=True)
        return (x - mu) * jax.lax.rsqrt(var + LN_EPS) * g + b

    img_h = jnp.maximum(lnf(image @ p["wi"] + p["bi"], p["gi"], p["bgi"]), 0.0)
    txt_h = jnp.maximum(lnf(text @ p["wt"] + p["bt"], p["gt"], p["bgt"]), 0.0)
    cat = jnp.concatenate([img_h, txt_h], axis=-1)
    fused = jnp.maximum(lnf(cat @ p["wf"] + p["bf"], p["gf"], p["bgf"]), 0.0)
    hid = jnp.maximum(lnf(fused @ p["wc1"] + p["bc1"], p["gc1"], p["bgc1"]), 0.0)
    return hid @ p["wc2"] + p["bc2"]


if __name__ == "__main__":
    key = jax.random.PRNGKey(0)
    k_img, k_txt, k_par = jax.random.split(key, 3)

    B = 16
    image = jax.random.normal(k_img, (B, IMAGE_DIM), jnp.float32)
    text = jax.random.normal(k_txt, (B, TEXT_DIM), jnp.float32)
    params = init_params(k_par)

    # One-time model-load prep (outside the jitted per-step forward).
    prepared = prepare_params(params)

    logits = multimodal_classifier_forward(image, text, prepared)
    logits = jax.block_until_ready(logits)

    ref = reference_forward(image, text, params)
    assert logits.shape == (B, NUM_CLASSES)
    max_err = float(jnp.max(jnp.abs(logits - ref)))
    # bf16 matmul / bf16 LN-affine path vs f32 reference -> loosened tolerance.
    assert jnp.allclose(logits, ref, atol=1e-1, rtol=1e-1), (
        f"mismatch vs reference, max abs err={max_err}"
    )

    print("KERNEL_OK")
</pallas_src>

<mosaic_0001>
module attributes {stable_mosaic.version = 11 : i64} {
  func.func @_mm_classifier_kernel(%arg0: i32, %arg1: memref<16x512xf32, #tpu.memory_space<vmem>>, %arg2: memref<16x512xf32, #tpu.memory_space<vmem>>, %arg3: memref<512x256xbf16, #tpu.memory_space<vmem>>, %arg4: memref<512x256xbf16, #tpu.memory_space<vmem>>, %arg5: memref<256x256xbf16, #tpu.memory_space<vmem>>, %arg6: memref<256x256xbf16, #tpu.memory_space<vmem>>, %arg7: memref<256x128xbf16, #tpu.memory_space<vmem>>, %arg8: memref<128x128xbf16, #tpu.memory_space<vmem>>, %arg9: memref<16x256xf32, #tpu.memory_space<vmem>>, %arg10: memref<16x128xf32, #tpu.memory_space<vmem>>) attributes {dimension_semantics = [#tpu.dimension_semantics<parallel>], iteration_bounds = array<i64: 1>, scalar_prefetch = 0 : i64, scratch_operands = 0 : i64, tpu.core_type = #tpu.core_type<tc>, window_params = [{transform_indices = @transform_0, window_bounds = array<i64: 16, 512>}, {transform_indices = @transform_1, window_bounds = array<i64: 16, 512>}, {pipeline_mode = #tpu.pipeline_mode<synchronous>, transform_indices = @transform_2, window_bounds = array<i64: 512, 256>}, {pipeline_mode = #tpu.pipeline_mode<synchronous>, transform_indices = @transform_3, window_bounds = array<i64: 512, 256>}, {pipeline_mode = #tpu.pipeline_mode<synchronous>, transform_indices = @transform_4, window_bounds = array<i64: 256, 256>}, {pipeline_mode = #tpu.pipeline_mode<synchronous>, transform_indices = @transform_5, window_bounds = array<i64: 256, 256>}, {pipeline_mode = #tpu.pipeline_mode<synchronous>, transform_indices = @transform_6, window_bounds = array<i64: 256, 128>}, {pipeline_mode = #tpu.pipeline_mode<synchronous>, transform_indices = @transform_7, window_bounds = array<i64: 128, 128>}, {pipeline_mode = #tpu.pipeline_mode<synchronous>, transform_indices = @transform_8, window_bounds = array<i64: 16, 256>}, {transform_indices = @transform_9, window_bounds = array<i64: 16, 128>}]} {
    %c0 = arith.constant 0 : index
    %c0_0 = arith.constant 0 : index
    %0 = vector.load %arg1[%c0, %c0_0] : memref<16x512xf32, #tpu.memory_space<vmem>>, vector<16x512xf32>
    %1 = arith.truncf %0 : vector<16x512xf32> to vector<16x512xbf16>
    %c0_1 = arith.constant 0 : index
    %c0_2 = arith.constant 0 : index
    %2 = vector.load %arg2[%c0_1, %c0_2] : memref<16x512xf32, #tpu.memory_space<vmem>>, vector<16x512xf32>
    %3 = arith.truncf %2 : vector<16x512xf32> to vector<16x512xbf16>
    %c0_3 = arith.constant 0 : index
    %c0_4 = arith.constant 0 : index
    %4 = vector.load %arg3[%c0_3, %c0_4] : memref<512x256xbf16, #tpu.memory_space<vmem>>, vector<512x256xbf16>
    %cst = arith.constant dense<0.000000e+00> : vector<16x256xf32>
    %5 = tpu.matmul %1, %4, %cst {dimension_numbers = #tpu.dot_dimension_numbers<[1], [0], [0], [1], [0, 0, 1, 1], [], []>} : vector<16x512xbf16>, vector<512x256xbf16>, vector<16x256xf32> -> vector<16x256xf32>
    %c0_5 = arith.constant 0 : index
    %c0_6 = arith.constant 0 : index
    %6 = vector.load %arg9[%c0_5, %c0_6] : memref<16x256xf32, #tpu.memory_space<vmem>>, vector<1x256xf32>
    %7 = vector.broadcast %6 : vector<1x256xf32> to vector<16x256xf32>
    %8 = arith.addf %5, %7 : vector<16x256xf32>
    %c1 = arith.constant 1 : index
    %c0_7 = arith.constant 0 : index
    %9 = vector.load %arg9[%c1, %c0_7] : memref<16x256xf32, #tpu.memory_space<vmem>>, vector<1x256xf32>
    %c2 = arith.constant 2 : index
    %c0_8 = arith.constant 0 : index
    %10 = vector.load %arg9[%c2, %c0_8] : memref<16x256xf32, #tpu.memory_space<vmem>>, vector<1x256xf32>
    %cst_9 = arith.constant dense<0.000000e+00> : vector<16xf32>
    %11 = vector.multi_reduction <add>, %8, %cst_9 [1] : vector<16x256xf32> to vector<16xf32>
    %12 = vector.shape_cast %11 : vector<16xf32> to vector<16x1xf32>
    %13 = arith.mulf %8, %8 : vector<16x256xf32>
    %cst_10 = arith.constant dense<0.000000e+00> : vector<16xf32>
    %14 = vector.multi_reduction <add>, %13, %cst_10 [1] : vector<16x256xf32> to vector<16xf32>
    %15 = vector.shape_cast %14 : vector<16xf32> to vector<16x1xf32>
    %cst_11 = arith.constant 3.906250e-03 : f32
    %16 = vector.broadcast %cst_11 : f32 to vector<16x1xf32>
    %17 = arith.mulf %12, %16 : vector<16x1xf32>
    %cst_12 = arith.constant 3.906250e-03 : f32
    %18 = vector.broadcast %cst_12 : f32 to vector<16x1xf32>
    %19 = arith.mulf %15, %18 : vector<16x1xf32>
    %20 = arith.mulf %17, %17 : vector<16x1xf32>
    %21 = arith.subf %19, %20 : vector<16x1xf32>
    %cst_13 = arith.constant 0.000000e+00 : f32
    %22 = vector.broadcast %cst_13 : f32 to vector<16x1xf32>
    %23 = arith.maximumf %21, %22 : vector<16x1xf32>
    %cst_14 = arith.constant 9.99999974E-6 : f32
    %24 = vector.broadcast %cst_14 : f32 to vector<16x1xf32>
    %25 = arith.addf %23, %24 : vector<16x1xf32>
    %26 = math.rsqrt %25 : vector<16x1xf32>
    %27 = vector.broadcast %17 : vector<16x1xf32> to vector<16x256xf32>
    %28 = arith.subf %8, %27 : vector<16x256xf32>
    %29 = vector.broadcast %26 : vector<16x1xf32> to vector<16x256xf32>
    %30 = arith.mulf %28, %29 : vector<16x256xf32>
    %31 = arith.truncf %30 : vector<16x256xf32> to vector<16x256xbf16>
    %32 = arith.truncf %9 : vector<1x256xf32> to vector<1x256xbf16>
    %33 = vector.broadcast %32 : vector<1x256xbf16> to vector<16x256xbf16>
    %34 = arith.mulf %31, %33 : vector<16x256xbf16>
    %35 = arith.truncf %10 : vector<1x256xf32> to vector<1x256xbf16>
    %36 = vector.broadcast %35 : vector<1x256xbf16> to vector<16x256xbf16>
    %37 = arith.addf %34, %36 : vector<16x256xbf16>
    %cst_15 = arith.constant 0.000000e+00 : bf16
    %38 = vector.broadcast %cst_15 : bf16 to vector<16x256xbf16>
    %39 = arith.maximumf %37, %38 : vector<16x256xbf16>
    %c0_16 = arith.constant 0 : index
    %c0_17 = arith.constant 0 : index
    %40 = vector.load %arg4[%c0_16, %c0_17] : memref<512x256xbf16, #tpu.memory_space<vmem>>, vector<512x256xbf16>
    %cst_18 = arith.constant dense<0.000000e+00> : vector<16x256xf32>
    %41 = tpu.matmul %3, %40, %cst_18 {dimension_numbers = #tpu.dot_dimension_numbers<[1], [0], [0], [1], [0, 0, 1, 1], [], []>} : vector<16x512xbf16>, vector<512x256xbf16>, vector<16x256xf32> -> vector<16x256xf32>
    %c3 = arith.constant 3 : index
    %c0_19 = arith.constant 0 : index
    %42 = vector.load %arg9[%c3, %c0_19] : memref<16x256xf32, #tpu.memory_space<vmem>>, vector<1x256xf32>
    %43 = vector.broadcast %42 : vector<1x256xf32> to vector<16x256xf32>
    %44 = arith.addf %41, %43 : vector<16x256xf32>
    %c4 = arith.constant 4 : index
    %c0_20 = arith.constant 0 : index
    %45 = vector.load %arg9[%c4, %c0_20] : memref<16x256xf32, #tpu.memory_space<vmem>>, vector<1x256xf32>
    %c5 = arith.constant 5 : index
    %c0_21 = arith.constant 0 : index
    %46 = vector.load %arg9[%c5, %c0_21] : memref<16x256xf32, #tpu.memory_space<vmem>>, vector<1x256xf32>
    %cst_22 = arith.constant dense<0.000000e+00> : vector<16xf32>
    %47 = vector.multi_reduction <add>, %44, %cst_22 [1] : vector<16x256xf32> to vector<16xf32>
    %48 = vector.shape_cast %47 : vector<16xf32> to vector<16x1xf32>
    %49 = arith.mulf %44, %44 : vector<16x256xf32>
    %cst_23 = arith.constant dense<0.000000e+00> : vector<16xf32>
    %50 = vector.multi_reduction <add>, %49, %cst_23 [1] : vector<16x256xf32> to vector<16xf32>
    %51 = vector.shape_cast %50 : vector<16xf32> to vector<16x1xf32>
    %cst_24 = arith.constant 3.906250e-03 : f32
    %52 = vector.broadcast %cst_24 : f32 to vector<16x1xf32>
    %53 = arith.mulf %48, %52 : vector<16x1xf32>
    %cst_25 = arith.constant 3.906250e-03 : f32
    %54 = vector.broadcast %cst_25 : f32 to vector<16x1xf32>
    %55 = arith.mulf %51, %54 : vector<16x1xf32>
    %56 = arith.mulf %53, %53 : vector<16x1xf32>
    %57 = arith.subf %55, %56 : vector<16x1xf32>
    %cst_26 = arith.constant 0.000000e+00 : f32
    %58 = vector.broadcast %cst_26 : f32 to vector<16x1xf32>
    %59 = arith.maximumf %57, %58 : vector<16x1xf32>
    %cst_27 = arith.constant 9.99999974E-6 : f32
    %60 = vector.broadcast %cst_27 : f32 to vector<16x1xf32>
    %61 = arith.addf %59, %60 : vector<16x1xf32>
    %62 = math.rsqrt %61 : vector<16x1xf32>
    %63 = vector.broadcast %53 : vector<16x1xf32> to vector<16x256xf32>
    %64 = arith.subf %44, %63 : vector<16x256xf32>
    %65 = vector.broadcast %62 : vector<16x1xf32> to vector<16x256xf32>
    %66 = arith.mulf %64, %65 : vector<16x256xf32>
    %67 = arith.truncf %66 : vector<16x256xf32> to vector<16x256xbf16>
    %68 = arith.truncf %45 : vector<1x256xf32> to vector<1x256xbf16>
    %69 = vector.broadcast %68 : vector<1x256xbf16> to vector<16x256xbf16>
    %70 = arith.mulf %67, %69 : vector<16x256xbf16>
    %71 = arith.truncf %46 : vector<1x256xf32> to vector<1x256xbf16>
    %72 = vector.broadcast %71 : vector<1x256xbf16> to vector<16x256xbf16>
    %73 = arith.addf %70, %72 : vector<16x256xbf16>
    %cst_28 = arith.constant 0.000000e+00 : bf16
    %74 = vector.broadcast %cst_28 : bf16 to vector<16x256xbf16>
    %75 = arith.maximumf %73, %74 : vector<16x256xbf16>
    %c0_29 = arith.constant 0 : index
    %c0_30 = arith.constant 0 : index
    %76 = vector.load %arg5[%c0_29, %c0_30] : memref<256x256xbf16, #tpu.memory_space<vmem>>, vector<256x256xbf16>
    %cst_31 = arith.constant dense<0.000000e+00> : vector<16x256xf32>
    %77 = tpu.matmul %39, %76, %cst_31 {dimension_numbers = #tpu.dot_dimension_numbers<[1], [0], [0], [1], [0, 0, 1, 1], [], []>} : vector<16x256xbf16>, vector<256x256xbf16>, vector<16x256xf32> -> vector<16x256xf32>
    %c0_32 = arith.constant 0 : index
    %c0_33 = arith.constant 0 : index
    %78 = vector.load %arg6[%c0_32, %c0_33] : memref<256x256xbf16, #tpu.memory_space<vmem>>, vector<256x256xbf16>
    %cst_34 = arith.constant dense<0.000000e+00> : vector<16x256xf32>
    %79 = tpu.matmul %75, %78, %cst_34 {dimension_numbers = #tpu.dot_dimension_numbers<[1], [0], [0], [1], [0, 0, 1, 1], [], []>} : vector<16x256xbf16>, vector<256x256xbf16>, vector<16x256xf32> -> vector<16x256xf32>
    %80 = arith.addf %77, %79 : vector<16x256xf32>
    %c6 = arith.constant 6 : index
    %c0_35 = arith.constant 0 : index
    %81 = vector.load %arg9[%c6, %c0_35] : memref<16x256xf32, #tpu.memory_space<vmem>>, vector<1x256xf32>
    %82 = vector.broadcast %81 : vector<1x256xf32> to vector<16x256xf32>
    %83 = arith.addf %80, %82 : vector<16x256xf32>
    %c7 = arith.constant 7 : index
    %c0_36 = arith.constant 0 : index
    %84 = vector.load %arg9[%c7, %c0_36] : memref<16x256xf32, #tpu.memory_space<vmem>>, vector<1x256xf32>
    %c8 = arith.constant 8 : index
    %c0_37 = arith.constant 0 : index
    %85 = vector.load %arg9[%c8, %c0_37] : memref<16x256xf32, #tpu.memory_space<vmem>>, vector<1x256xf32>
    %cst_38 = arith.constant dense<0.000000e+00> : vector<16xf32>
    %86 = vector.multi_reduction <add>, %83, %cst_38 [1] : vector<16x256xf32> to vector<16xf32>
    %87 = vector.shape_cast %86 : vector<16xf32> to vector<16x1xf32>
    %88 = arith.mulf %83, %83 : vector<16x256xf32>
    %cst_39 = arith.constant dense<0.000000e+00> : vector<16xf32>
    %89 = vector.multi_reduction <add>, %88, %cst_39 [1] : vector<16x256xf32> to vector<16xf32>
    %90 = vector.shape_cast %89 : vector<16xf32> to vector<16x1xf32>
    %cst_40 = arith.constant 3.906250e-03 : f32
    %91 = vector.broadcast %cst_40 : f32 to vector<16x1xf32>
    %92 = arith.mulf %87, %91 : vector<16x1xf32>
    %cst_41 = arith.constant 3.906250e-03 : f32
    %93 = vector.broadcast %cst_41 : f32 to vector<16x1xf32>
    %94 = arith.mulf %90, %93 : vector<16x1xf32>
    %95 = arith.mulf %92, %92 : vector<16x1xf32>
    %96 = arith.subf %94, %95 : vector<16x1xf32>
    %cst_42 = arith.constant 0.000000e+00 : f32
    %97 = vector.broadcast %cst_42 : f32 to vector<16x1xf32>
    %98 = arith.maximumf %96, %97 : vector<16x1xf32>
    %cst_43 = arith.constant 9.99999974E-6 : f32
    %99 = vector.broadcast %cst_43 : f32 to vector<16x1xf32>
    %100 = arith.addf %98, %99 : vector<16x1xf32>
    %101 = math.rsqrt %100 : vector<16x1xf32>
    %102 = vector.broadcast %92 : vector<16x1xf32> to vector<16x256xf32>
    %103 = arith.subf %83, %102 : vector<16x256xf32>
    %104 = vector.broadcast %101 : vector<16x1xf32> to vector<16x256xf32>
    %105 = arith.mulf %103, %104 : vector<16x256xf32>
    %106 = arith.truncf %105 : vector<16x256xf32> to vector<16x256xbf16>
    %107 = arith.truncf %84 : vector<1x256xf32> to vector<1x256xbf16>
    %108 = vector.broadcast %107 : vector<1x256xbf16> to vector<16x256xbf16>
    %109 = arith.mulf %106, %108 : vector<16x256xbf16>
    %110 = arith.truncf %85 : vector<1x256xf32> to vector<1x256xbf16>
    %111 = vector.broadcast %110 : vector<1x256xbf16> to vector<16x256xbf16>
    %112 = arith.addf %109, %111 : vector<16x256xbf16>
    %cst_44 = arith.constant 0.000000e+00 : bf16
    %113 = vector.broadcast %cst_44 : bf16 to vector<16x256xbf16>
    %114 = arith.maximumf %112, %113 : vector<16x256xbf16>
    %c0_45 = arith.constant 0 : index
    %c0_46 = arith.constant 0 : index
    %115 = vector.load %arg7[%c0_45, %c0_46] : memref<256x128xbf16, #tpu.memory_space<vmem>>, vector<256x128xbf16>
    %cst_47 = arith.constant dense<0.000000e+00> : vector<16x128xf32>
    %116 = tpu.matmul %114, %115, %cst_47 {dimension_numbers = #tpu.dot_dimension_numbers<[1], [0], [0], [1], [0, 0, 1, 1], [], []>} : vector<16x256xbf16>, vector<256x128xbf16>, vector<16x128xf32> -> vector<16x128xf32>
    %c9 = arith.constant 9 : index
    %c0_48 = arith.constant 0 : index
    %117 = vector.load %arg9[%c9, %c0_48] : memref<16x256xf32, #tpu.memory_space<vmem>>, vector<1x128xf32>
    %118 = vector.broadcast %117 : vector<1x128xf32> to vector<16x128xf32>
    %119 = arith.addf %116, %118 : vector<16x128xf32>
    %c10 = arith.constant 10 : index
    %c0_49 = arith.constant 0 : index
    %120 = vector.load %arg9[%c10, %c0_49] : memref<16x256xf32, #tpu.memory_space<vmem>>, vector<1x128xf32>
    %c11 = arith.constant 11 : index
    %c0_50 = arith.constant 0 : index
    %121 = vector.load %arg9[%c11, %c0_50] : memref<16x256xf32, #tpu.memory_space<vmem>>, vector<1x128xf32>
    %cst_51 = arith.constant dense<0.000000e+00> : vector<16xf32>
    %122 = vector.multi_reduction <add>, %119, %cst_51 [1] : vector<16x128xf32> to vector<16xf32>
    %123 = vector.shape_cast %122 : vector<16xf32> to vector<16x1xf32>
    %124 = arith.mulf %119, %119 : vector<16x128xf32>
    %cst_52 = arith.constant dense<0.000000e+00> : vector<16xf32>
    %125 = vector.multi_reduction <add>, %124, %cst_52 [1] : vector<16x128xf32> to vector<16xf32>
    %126 = vector.shape_cast %125 : vector<16xf32> to vector<16x1xf32>
    %cst_53 = arith.constant 7.812500e-03 : f32
    %127 = vector.broadcast %cst_53 : f32 to vector<16x1xf32>
    %128 = arith.mulf %123, %127 : vector<16x1xf32>
    %cst_54 = arith.constant 7.812500e-03 : f32
    %129 = vector.broadcast %cst_54 : f32 to vector<16x1xf32>
    %130 = arith.mulf %126, %129 : vector<16x1xf32>
    %131 = arith.mulf %128, %128 : vector<16x1xf32>
    %132 = arith.subf %130, %131 : vector<16x1xf32>
    %cst_55 = arith.constant 0.000000e+00 : f32
    %133 = vector.broadcast %cst_55 : f32 to vector<16x1xf32>
    %134 = arith.maximumf %132, %133 : vector<16x1xf32>
    %cst_56 = arith.constant 9.99999974E-6 : f32
    %135 = vector.broadcast %cst_56 : f32 to vector<16x1xf32>
    %136 = arith.addf %134, %135 : vector<16x1xf32>
    %137 = math.rsqrt %136 : vector<16x1xf32>
    %138 = vector.broadcast %128 : vector<16x1xf32> to vector<16x128xf32>
    %139 = arith.subf %119, %138 : vector<16x128xf32>
    %140 = vector.broadcast %137 : vector<16x1xf32> to vector<16x128xf32>
    %141 = arith.mulf %139, %140 : vector<16x128xf32>
    %142 = arith.truncf %141 : vector<16x128xf32> to vector<16x128xbf16>
    %143 = arith.truncf %120 : vector<1x128xf32> to vector<1x128xbf16>
    %144 = vector.broadcast %143 : vector<1x128xbf16> to vector<16x128xbf16>
    %145 = arith.mulf %142, %144 : vector<16x128xbf16>
    %146 = arith.truncf %121 : vector<1x128xf32> to vector<1x128xbf16>
    %147 = vector.broadcast %146 : vector<1x128xbf16> to vector<16x128xbf16>
    %148 = arith.addf %145, %147 : vector<16x128xbf16>
    %cst_57 = arith.constant 0.000000e+00 : bf16
    %149 = vector.broadcast %cst_57 : bf16 to vector<16x128xbf16>
    %150 = arith.maximumf %148, %149 : vector<16x128xbf16>
    %c0_58 = arith.constant 0 : index
    %c0_59 = arith.constant 0 : index
    %151 = vector.load %arg8[%c0_58, %c0_59] : memref<128x128xbf16, #tpu.memory_space<vmem>>, vector<128x128xbf16>
    %cst_60 = arith.constant dense<0.000000e+00> : vector<16x128xf32>
    %152 = tpu.matmul %150, %151, %cst_60 {dimension_numbers = #tpu.dot_dimension_numbers<[1], [0], [0], [1], [0, 0, 1, 1], [], []>} : vector<16x128xbf16>, vector<128x128xbf16>, vector<16x128xf32> -> vector<16x128xf32>
    %c12 = arith.constant 12 : index
    %c0_61 = arith.constant 0 : index
    %153 = vector.load %arg9[%c12, %c0_61] : memref<16x256xf32, #tpu.memory_space<vmem>>, vector<1x128xf32>
    %154 = vector.broadcast %153 : vector<1x128xf32> to vector<16x128xf32>
    %155 = arith.addf %152, %154 : vector<16x128xf32>
    %c0_62 = arith.constant 0 : index
    %c0_63 = arith.constant 0 : index
    %156 = vector.load %arg10[%c0_62, %c0_63] : memref<16x128xf32, #tpu.memory_space<vmem>>, vector<16x128xf32>
    tpu.vector_store %arg10[%c0_62, %c0_63], %155 {strides = array<i32>} : memref<16x128xf32, #tpu.memory_space<vmem>>, vector<16x128xf32>,
    return
  }
  func.func @transform_0(%arg0: i32) -> (i32, i32) {
    %c0_i32 = arith.constant 0 : i32
    %c0_i32_0 = arith.constant 0 : i32
    return %arg0, %c0_i32 : i32, i32
  }
  func.func @transform_1(%arg0: i32) -> (i32, i32) {
    %c0_i32 = arith.constant 0 : i32
    %c0_i32_0 = arith.constant 0 : i32
    return %arg0, %c0_i32 : i32, i32
  }
  func.func @transform_2(%arg0: i32) -> (i32, i32) {
    %c0_i32 = arith.constant 0 : i32
    %c0_i32_0 = arith.constant 0 : i32
    %c0_i32_1 = arith.constant 0 : i32
    return %c0_i32, %c0_i32_0 : i32, i32
  }
  func.func @transform_3(%arg0: i32) -> (i32, i32) {
    %c0_i32 = arith.constant 0 : i32
    %c0_i32_0 = arith.constant 0 : i32
    %c0_i32_1 = arith.constant 0 : i32
    return %c0_i32, %c0_i32_0 : i32, i32
  }
  func.func @transform_4(%arg0: i32) -> (i32, i32) {
    %c0_i32 = arith.constant 0 : i32
    %c0_i32_0 = arith.constant 0 : i32
    %c0_i32_1 = arith.constant 0 : i32
    return %c0_i32, %c0_i32_0 : i32, i32
  }
  func.func @transform_5(%arg0: i32) -> (i32, i32) {
    %c0_i32 = arith.constant 0 : i32
    %c0_i32_0 = arith.constant 0 : i32
    %c0_i32_1 = arith.constant 0 : i32
    return %c0_i32, %c0_i32_0 : i32, i32
  }
  func.func @transform_6(%arg0: i32) -> (i32, i32) {
    %c0_i32 = arith.constant 0 : i32
    %c0_i32_0 = arith.constant 0 : i32
    %c0_i32_1 = arith.constant 0 : i32
    return %c0_i32, %c0_i32_0 : i32, i32
  }
  func.func @transform_7(%arg0: i32) -> (i32, i32) {
    %c0_i32 = arith.constant 0 : i32
    %c0_i32_0 = arith.constant 0 : i32
    %c0_i32_1 = arith.constant 0 : i32
    return %c0_i32, %c0_i32_0 : i32, i32
  }
  func.func @transform_8(%arg0: i32) -> (i32, i32) {
    %c0_i32 = arith.constant 0 : i32
    %c0_i32_0 = arith.constant 0 : i32
    %c0_i32_1 = arith.constant 0 : i32
    return %c0_i32, %c0_i32_0 : i32, i32
  }
  func.func @transform_9(%arg0: i32) -> (i32, i32) {
    %c0_i32 = arith.constant 0 : i32
    %c0_i32_0 = arith.constant 0 : i32
    return %arg0, %c0_i32 : i32, i32
  }
}

</mosaic_0001>

<llo_original>
// kernel: multimodal_classifier_forward.1
$region0: #{multimodal_classifier_forward.1}
  #allocation0 [shape = 'u32[]', space=smem, size = 0x4, offset = 0x4, fixed_abs, tag = 'smem constant byte address 0x4 - core index']
  #allocation1 [shape = 'u32[144,128]{1,0:T(1,128)}', space=vmem, size = 0x12000, scoped, tag = 'internal scratch']
  %s0 = inlined_call_operand.hbm [shape: f32[16,512], index: 0, kind: input, shape index: {}]
  %s1 = inlined_call_operand.hbm [shape: f32[16,512], index: 1, kind: input, shape index: {}]
  %s2 = inlined_call_operand.hbm [shape: bf16[512,256], index: 2, kind: input, shape index: {}]
  %s3 = inlined_call_operand.hbm [shape: bf16[512,256], index: 3, kind: input, shape index: {}]
  %s4 = inlined_call_operand.hbm [shape: bf16[256,256], index: 4, kind: input, shape index: {}]
  %s5 = inlined_call_operand.hbm [shape: bf16[256,256], index: 5, kind: input, shape index: {}]
  %s6 = inlined_call_operand.hbm [shape: bf16[256,128], index: 6, kind: input, shape index: {}]
  %s7 = inlined_call_operand.hbm [shape: bf16[128,128], index: 7, kind: input, shape index: {}]
  %s8 = inlined_call_operand.hbm [shape: f32[16,256], index: 8, kind: input, shape index: {}]
  %s9 = inlined_call_operand.hbm [shape: f32[16,128], index: 9, kind: output, shape index: {}]
  %s10 = sld [smem:[#allocation0]]
  $region82: #{multimodal_classifier_forward.1} parent=0
    _
  %s12 = ssub.s32 1, %s10
  %s13 = scalar_select 0, %s12, %s10
  $region1: #{multimodal_classifier_forward.1} parent=0
    #allocation2 [shape = 'u8[32768]{0}', space=vmem, size = 0x8000, scoped, tag = 'input window, operand 0, single buffered']
    #allocation3 [shape = 's32[1]{0}', space=sflag, size = 0x4, scoped, tag = 'scoped memory for multimodal_classifier_forward.1']
    #allocation4 [shape = 's32[1]{0}', space=sflag, size = 0x4, scoped, tag = 'scoped memory for multimodal_classifier_forward.1']
    #allocation5 [shape = 'u8[32768]{0}', space=vmem, size = 0x8000, scoped, tag = 'input window, operand 1, single buffered']
    #allocation6 [shape = 's32[1]{0}', space=sflag, size = 0x4, scoped, tag = 'scoped memory for multimodal_classifier_forward.1']
    #allocation7 [shape = 'u8[262144]{0}', space=vmem, size = 0x40000, scoped, tag = 'input window, operand 2, single buffered']
    #allocation8 [shape = 'u8[262144]{0}', space=vmem, size = 0x40000, scoped, tag = 'input window, operand 3, single buffered']
    #allocation9 [shape = 's32[1]{0}', space=sflag, size = 0x4, scoped, tag = 'scoped memory for multimodal_classifier_forward.1']
    #allocation10 [shape = 'u8[131072]{0}', space=vmem, size = 0x20000, scoped, tag = 'input window, operand 4, single buffered']
    #allocation11 [shape = 'u8[131072]{0}', space=vmem, size = 0x20000, scoped, tag = 'input window, operand 5, single buffered']
    #allocation12 [shape = 's32[1]{0}', space=sflag, size = 0x4, scoped, tag = 'scoped memory for multimodal_classifier_forward.1']
    #allocation13 [shape = 'u8[65536]{0}', space=vmem, size = 0x10000, scoped, tag = 'input window, operand 6, single buffered']
    #allocation14 [shape = 'u8[32768]{0}', space=vmem, size = 0x8000, scoped, tag = 'input window, operand 7, single buffered']
    #allocation15 [shape = 's32[1]{0}', space=sflag, size = 0x4, scoped, tag = 'scoped memory for multimodal_classifier_forward.1']
    #allocation16 [shape = 'u8[16384]{0}', space=vmem, size = 0x4000, scoped, tag = 'input window, operand 8, single buffered']
    #allocation17 [shape = 'u8[8192]{0}', space=vmem, size = 0x2000, scoped, tag = 'output window, operand 0, single buffered']
    %14 = vsyncpa [#allocation3], 0
    %15 = vsyncpa [#allocation6], 0
    %16 = vsyncpa [#allocation9], 0
    %17 = vsyncpa [#allocation12], 0
    %18 = vsyncpa [#allocation15], 0
    %19 = vsyncpa [#allocation4], 0
    // Predicated region
    $region2: #{multimodal_classifier_forward.1} parent=1 // pred_check
      _
    $region3: #{multimodal_classifier_forward.1} parent=1 // pred_check_branch
      %21 = sbr.rel (0) target = $region5
    $region4: #{multimodal_classifier_forward.1} parent=1 // pred_region
      %s23 = ssub.s32 1024, 1024
      %24 = vsyncadd [#allocation3], %s23
      %s25 = sshll.u32 [#allocation2], 4
      %s26 = int_to_ptr.vmem [resolvable:$true] %s25
      %31 = dma.hbm_to_vmem [thread:$0]  %s0, 1024, %s26, [#allocation3], 512, 512, 32
    $region5: #{multimodal_classifier_forward.1} parent=1 // pred_fallthru
      _
    // Predicated region
    $region6: #{multimodal_classifier_forward.1} parent=1 // pred_check
      _
    $region7: #{multimodal_classifier_forward.1} parent=1 // pred_check_branch
      %33 = sbr.rel (0) target = $region9
    $region8: #{multimodal_classifier_forward.1} parent=1 // pred_region
      %s35 = ssub.s32 1024, 1024
      %36 = vsyncadd [#allocation6], %s35
      %s37 = sshll.u32 [#allocation5], 4
      %s38 = int_to_ptr.vmem [resolvable:$true] %s37
      %43 = dma.hbm_to_vmem [thread:$0]  %s1, 1024, %s38, [#allocation6], 512, 512, 32
    $region9: #{multimodal_classifier_forward.1} parent=1 // pred_fallthru
      _
    // Predicated region
    $region10: #{multimodal_classifier_forward.1} parent=1 // pred_check
      _
    $region11: #{multimodal_classifier_forward.1} parent=1 // pred_check_branch
      %45 = sbr.rel (0) target = $region13
    $region12: #{multimodal_classifier_forward.1} parent=1 // pred_region
      %s47 = ssub.s32 8192, 8192
      %48 = vsyncadd [#allocation6], %s47
      %s49 = sshll.u32 [#allocation7], 4
      %s50 = int_to_ptr.vmem [resolvable:$true] %s49
      %55 = dma.hbm_to_vmem [thread:$0]  %s2, 8192, %s50, [#allocation6], 128, 128, 8
    $region13: #{multimodal_classifier_forward.1} parent=1 // pred_fallthru
      _
    // Predicated region
    $region14: #{multimodal_classifier_forward.1} parent=1 // pred_check
      _
    $region15: #{multimodal_classifier_forward.1} parent=1 // pred_check_branch
      %57 = sbr.rel (0) target = $region17
    $region16: #{multimodal_classifier_forward.1} parent=1 // pred_region
      %s59 = ssub.s32 8192, 8192
      %60 = vsyncadd [#allocation9], %s59
      %s61 = sshll.u32 [#allocation8], 4
      %s62 = int_to_ptr.vmem [resolvable:$true] %s61
      %67 = dma.hbm_to_vmem [thread:$0]  %s3, 8192, %s62, [#allocation9], 128, 128, 8
    $region17: #{multimodal_classifier_forward.1} parent=1 // pred_fallthru
      _
    // Predicated region
    $region18: #{multimodal_classifier_forward.1} parent=1 // pred_check
      _
    $region19: #{multimodal_classifier_forward.1} parent=1 // pred_check_branch
      %69 = sbr.rel (0) target = $region21
    $region20: #{multimodal_classifier_forward.1} parent=1 // pred_region
      %s71 = ssub.s32 4096, 4096
      %72 = vsyncadd [#allocation9], %s71
      %s73 = sshll.u32 [#allocation10], 4
      %s74 = int_to_ptr.vmem [resolvable:$true] %s73
      %79 = dma.hbm_to_vmem [thread:$0]  %s4, 4096, %s74, [#allocation9], 128, 128, 8
    $region21: #{multimodal_classifier_forward.1} parent=1 // pred_fallthru
      _
    // Predicated region
    $region22: #{multimodal_classifier_forward.1} parent=1 // pred_check
      _
    $region23: #{multimodal_classifier_forward.1} parent=1 // pred_check_branch
      %81 = sbr.rel (0) target = $region25
    $region24: #{multimodal_classifier_forward.1} parent=1 // pred_region
      %s83 = ssub.s32 4096, 4096
      %84 = vsyncadd [#allocation12], %s83
      %s85 = sshll.u32 [#allocation11], 4
      %s86 = int_to_ptr.vmem [resolvable:$true] %s85
      %91 = dma.hbm_to_vmem [thread:$0]  %s5, 4096, %s86, [#allocation12], 128, 128, 8
    $region25: #{multimodal_classifier_forward.1} parent=1 // pred_fallthru
      _
    // Predicated region
    $region26: #{multimodal_classifier_forward.1} parent=1 // pred_check
      _
    $region27: #{multimodal_classifier_forward.1} parent=1 // pred_check_branch
      %93 = sbr.rel (0) target = $region29
    $region28: #{multimodal_classifier_forward.1} parent=1 // pred_region
      %s95 = ssub.s32 2048, 2048
      %96 = vsyncadd [#allocation12], %s95
      %s97 = sshll.u32 [#allocation13], 4
      %s98 = int_to_ptr.vmem [resolvable:$true] %s97
      %103 = dma.hbm_to_vmem [thread:$0]  %s6, 2048, %s98, [#allocation12], 64, 64, 4
    $region29: #{multimodal_classifier_forward.1} parent=1 // pred_fallthru
      _
    // Predicated region
    $region30: #{multimodal_classifier_forward.1} parent=1 // pred_check
      _
    $region31: #{multimodal_classifier_forward.1} parent=1 // pred_check_branch
      %105 = sbr.rel (0) target = $region33
    $region32: #{multimodal_classifier_forward.1} parent=1 // pred_region
      %s107 = ssub.s32 1024, 1024
      %108 = vsyncadd [#allocation15], %s107
      %s109 = sshll.u32 [#allocation14], 4
      %s110 = int_to_ptr.vmem [resolvable:$true] %s109
      %115 = dma.hbm_to_vmem [thread:$0]  %s7, 1024, %s110, [#allocation15], 64, 64, 4
    $region33: #{multimodal_classifier_forward.1} parent=1 // pred_fallthru
      _
    // Predicated region
    $region34: #{multimodal_classifier_forward.1} parent=1 // pred_check
      _
    $region35: #{multimodal_classifier_forward.1} parent=1 // pred_check_branch
      %117 = sbr.rel (0) target = $region37
    $region36: #{multimodal_classifier_forward.1} parent=1 // pred_region
      %s119 = ssub.s32 512, 512
      %120 = vsyncadd [#allocation15], %s119
      %s121 = sshll.u32 [#allocation16], 4
      %s122 = int_to_ptr.vmem [resolvable:$true] %s121
      %127 = dma.hbm_to_vmem [thread:$0]  %s8, 512, %s122, [#allocation15], 256, 256, 16
    $region37: #{multimodal_classifier_forward.1} parent=1 // pred_fallthru
      _
    // Predicated region
    $region38: #{multimodal_classifier_forward.1} parent=1 // pred_check
      _
    $region39: #{multimodal_classifier_forward.1} parent=1 // pred_check_branch
      %129 = sbr.rel (0) target = $region41
    $region40: #{multimodal_classifier_forward.1} parent=1 // pred_region
      %130 = dma.done [#allocation3], 1024
    $region41: #{multimodal_classifier_forward.1} parent=1 // pred_fallthru
      _
    // Predicated region
    $region42: #{multimodal_classifier_forward.1} parent=1 // pred_check
      _
    $region43: #{multimodal_classifier_forward.1} parent=1 // pred_check_branch
      %132 = sbr.rel (0) target = $region45
    $region44: #{multimodal_classifier_forward.1} parent=1 // pred_region
      %133 = dma.done [#allocation6], 1024
    $region45: #{multimodal_classifier_forward.1} parent=1 // pred_fallthru
      _
    // Predicated region
    $region46: #{multimodal_classifier_forward.1} parent=1 // pred_check
      _
    $region47: #{multimodal_classifier_forward.1} parent=1 // pred_check_branch
      %135 = sbr.rel (0) target = $region49
    $region48: #{multimodal_classifier_forward.1} parent=1 // pred_region
      %136 = dma.done [#allocation6], 8192
    $region49: #{multimodal_classifier_forward.1} parent=1 // pred_fallthru
      _
    // Predicated region
    $region50: #{multimodal_classifier_forward.1} parent=1 // pred_check
      _
    $region51: #{multimodal_classifier_forward.1} parent=1 // pred_check_branch
      %138 = sbr.rel (0) target = $region53
    $region52: #{multimodal_classifier_forward.1} parent=1 // pred_region
      %139 = dma.done [#allocation9], 8192
    $region53: #{multimodal_classifier_forward.1} parent=1 // pred_fallthru
      _
    // Predicated region
    $region54: #{multimodal_classifier_forward.1} parent=1 // pred_check
      _
    $region55: #{multimodal_classifier_forward.1} parent=1 // pred_check_branch
      %141 = sbr.rel (0) target = $region57
    $region56: #{multimodal_classifier_forward.1} parent=1 // pred_region
      %142 = dma.done [#allocation9], 4096
    $region57: #{multimodal_classifier_forward.1} parent=1 // pred_fallthru
      _
    // Predicated region
    $region58: #{multimodal_classifier_forward.1} parent=1 // pred_check
      _
    $region59: #{multimodal_classifier_forward.1} parent=1 // pred_check_branch
      %144 = sbr.rel (0) target = $region61
    $region60: #{multimodal_classifier_forward.1} parent=1 // pred_region
      %145 = dma.done [#allocation12], 4096
    $region61: #{multimodal_classifier_forward.1} parent=1 // pred_fallthru
      _
    // Predicated region
    $region62: #{multimodal_classifier_forward.1} parent=1 // pred_check
      _
    $region63: #{multimodal_classifier_forward.1} parent=1 // pred_check_branch
      %147 = sbr.rel (0) target = $region65
    $region64: #{multimodal_classifier_forward.1} parent=1 // pred_region
      %148 = dma.done [#allocation12], 2048
    $region65: #{multimodal_classifier_forward.1} parent=1 // pred_fallthru
      _
    // Predicated region
    $region66: #{multimodal_classifier_forward.1} parent=1 // pred_check
      _
    $region67: #{multimodal_classifier_forward.1} parent=1 // pred_check_branch
      %150 = sbr.rel (0) target = $region69
    $region68: #{multimodal_classifier_forward.1} parent=1 // pred_region
      %151 = dma.done [#allocation15], 1024
    $region69: #{multimodal_classifier_forward.1} parent=1 // pred_fallthru
      _
    // Predicated region
    $region70: #{multimodal_classifier_forward.1} parent=1 // pred_check
      _
    $region71: #{multimodal_classifier_forward.1} parent=1 // pred_check_branch
      %153 = sbr.rel (0) target = $region73
    $region72: #{multimodal_classifier_forward.1} parent=1 // pred_region
      %154 = dma.done [#allocation15], 512
    $region73: #{multimodal_classifier_forward.1} parent=1 // pred_fallthru
      _
    %v156 = vld [vmem:[#allocation2] sm:$0xff]
    %v157 = vld [vmem:[#allocation2 + $0x8] sm:$0xff]
    %v158 = vld [vmem:[#allocation2 + $0x10] sm:$0xff]
    %v159 = vld [vmem:[#allocation2 + $0x18] sm:$0xff]
    %v160 = vld [vmem:[#allocation2 + $0x20] sm:$0xff]
    %v161 = vld [vmem:[#allocation2 + $0x28] sm:$0xff]
    %v162 = vld [vmem:[#allocation2 + $0x30] sm:$0xff]
    %v163 = vld [vmem:[#allocation2 + $0x38] sm:$0xff]
    %v164 = vpack.c.bf16 %v160, %v156
    %v165 = vpack.c.bf16 %v161, %v157
    %v166 = vpack.c.bf16 %v162, %v158
    %v167 = vpack.c.bf16 %v163, %v159
    %v168 = vld [vmem:[#allocation5] sm:$0xff]
    %v169 = vld [vmem:[#allocation5 + $0x8] sm:$0xff]
    %v170 = vld [vmem:[#allocation5 + $0x10] sm:$0xff]
    %v171 = vld [vmem:[#allocation5 + $0x18] sm:$0xff]
    %v172 = vld [vmem:[#allocation5 + $0x20] sm:$0xff]
    %v173 = vld [vmem:[#allocation5 + $0x28] sm:$0xff]
    %v174 = vld [vmem:[#allocation5 + $0x30] sm:$0xff]
    %v175 = vld [vmem:[#allocation5 + $0x38] sm:$0xff]
    %v176 = vpack.c.bf16 %v172, %v168
    %v177 = vpack.c.bf16 %v173, %v169
    %v178 = vpack.c.bf16 %v174, %v170
    %v179 = vpack.c.bf16 %v175, %v171
    %v180 = vld [vmem:[#allocation7] sm:$0xff]
    %v181 = vld [vmem:[#allocation7 + $0x8] sm:$0xff]
    %v182 = vld [vmem:[#allocation7 + $0x10] sm:$0xff]
    %v183 = vld [vmem:[#allocation7 + $0x18] sm:$0xff]
    %v184 = vld [vmem:[#allocation7 + $0x20] sm:$0xff]
    %v185 = vld [vmem:[#allocation7 + $0x28] sm:$0xff]
    %v186 = vld [vmem:[#allocation7 + $0x30] sm:$0xff]
    %v187 = vld [vmem:[#allocation7 + $0x38] sm:$0xff]
    %v188 = vld [vmem:[#allocation7 + $0x40] sm:$0xff]
    %v189 = vld [vmem:[#allocation7 + $0x48] sm:$0xff]
    %v190 = vld [vmem:[#allocation7 + $0x50] sm:$0xff]
    %v191 = vld [vmem:[#allocation7 + $0x58] sm:$0xff]
    %v192 = vld [vmem:[#allocation7 + $0x60] sm:$0xff]
    %v193 = vld [vmem:[#allocation7 + $0x68] sm:$0xff]
    %v194 = vld [vmem:[#allocation7 + $0x70] sm:$0xff]
    %v195 = vld [vmem:[#allocation7 + $0x78] sm:$0xff]
    %v196 = vld [vmem:[#allocation7 + $0x80] sm:$0xff]
    %v197 = vld [vmem:[#allocation7 + $0x88] sm:$0xff]
    %v198 = vld [vmem:[#allocation7 + $0x90] sm:$0xff]
    %v199 = vld [vmem:[#allocation7 + $0x98] sm:$0xff]
    %v200 = vld [vmem:[#allocation7 + $0xa0] sm:$0xff]
    %v201 = vld [vmem:[#allocation7 + $0xa8] sm:$0xff]
    %v202 = vld [vmem:[#allocation7 + $0xb0] sm:$0xff]
    %v203 = vld [vmem:[#allocation7 + $0xb8] sm:$0xff]
    %v204 = vld [vmem:[#allocation7 + $0xc0] sm:$0xff]
    %v205 = vld [vmem:[#allocation7 + $0xc8] sm:$0xff]
    %v206 = vld [vmem:[#allocation7 + $0xd0] sm:$0xff]
    %v207 = vld [vmem:[#allocation7 + $0xd8] sm:$0xff]
    %v208 = vld [vmem:[#allocation7 + $0xe0] sm:$0xff]
    %v209 = vld [vmem:[#allocation7 + $0xe8] sm:$0xff]
    %v210 = vld [vmem:[#allocation7 + $0xf0] sm:$0xff]
    %v211 = vld [vmem:[#allocation7 + $0xf8] sm:$0xff]
    %v212 = vld [vmem:[#allocation7 + $0x100] sm:$0xff]
    %v213 = vld [vmem:[#allocation7 + $0x108] sm:$0xff]
    %v214 = vld [vmem:[#allocation7 + $0x110] sm:$0xff]
    %v215 = vld [vmem:[#allocation7 + $0x118] sm:$0xff]
    %v216 = vld [vmem:[#allocation7 + $0x120] sm:$0xff]
    %v217 = vld [vmem:[#allocation7 + $0x128] sm:$0xff]
    %v218 = vld [vmem:[#allocation7 + $0x130] sm:$0xff]
    %v219 = vld [vmem:[#allocation7 + $0x138] sm:$0xff]
    %v220 = vld [vmem:[#allocation7 + $0x140] sm:$0xff]
    %v221 = vld [vmem:[#allocation7 + $0x148] sm:$0xff]
    %v222 = vld [vmem:[#allocation7 + $0x150] sm:$0xff]
    %v223 = vld [vmem:[#allocation7 + $0x158] sm:$0xff]
    %v224 = vld [vmem:[#allocation7 + $0x160] sm:$0xff]
    %v225 = vld [vmem:[#allocation7 + $0x168] sm:$0xff]
    %v226 = vld [vmem:[#allocation7 + $0x170] sm:$0xff]
    %v227 = vld [vmem:[#allocation7 + $0x178] sm:$0xff]
    %v228 = vld [vmem:[#allocation7 + $0x180] sm:$0xff]
    %v229 = vld [vmem:[#allocation7 + $0x188] sm:$0xff]
    %v230 = vld [vmem:[#allocation7 + $0x190] sm:$0xff]
    %v231 = vld [vmem:[#allocation7 + $0x198] sm:$0xff]
    %v232 = vld [vmem:[#allocation7 + $0x1a0] sm:$0xff]
    %v233 = vld [vmem:[#allocation7 + $0x1a8] sm:$0xff]
    %v234 = vld [vmem:[#allocation7 + $0x1b0] sm:$0xff]
    %v235 = vld [vmem:[#allocation7 + $0x1b8] sm:$0xff]
    %v236 = vld [vmem:[#allocation7 + $0x1c0] sm:$0xff]
    %v237 = vld [vmem:[#allocation7 + $0x1c8] sm:$0xff]
    %v238 = vld [vmem:[#allocation7 + $0x1d0] sm:$0xff]
    %v239 = vld [vmem:[#allocation7 + $0x1d8] sm:$0xff]
    %v240 = vld [vmem:[#allocation7 + $0x1e0] sm:$0xff]
    %v241 = vld [vmem:[#allocation7 + $0x1e8] sm:$0xff]
    %v242 = vld [vmem:[#allocation7 + $0x1f0] sm:$0xff]
    %v243 = vld [vmem:[#allocation7 + $0x1f8] sm:$0xff]
    %v244 = vld [vmem:[#allocation16] ss:$8 sm:$0x3]
    %v246 = vlaneseq
    %v247 = vshrl.u32 %v246, 7
    %v248 = vsub.s32 0, %v247
    %v249 = vrot.slane %v244, %v248
    %v250 = vlaneseq
    %v251 = vshrl.u32 %v250, 7
    %v252 = vsub.s32 1, %v251
    %v253 = vrot.slane %v244, %v252
    %v320 = vunpack.c.l.b16 %v180
    %v321 = vunpack.c.h.b16 %v180
    %v322 = vunpack.c.l.b16 %v181
    %v323 = vunpack.c.h.b16 %v181
    %v324 = vunpack.c.l.b16 %v182
    %v325 = vunpack.c.h.b16 %v182
    %v326 = vunpack.c.l.b16 %v183
    %v327 = vunpack.c.h.b16 %v183
    %v328 = vunpack.c.l.b16 %v184
    %v329 = vunpack.c.h.b16 %v184
    %v330 = vunpack.c.l.b16 %v185
    %v331 = vunpack.c.h.b16 %v185
    %v332 = vunpack.c.l.b16 %v186
    %v333 = vunpack.c.h.b16 %v186
    %v334 = vunpack.c.l.b16 %v187
    %v335 = vunpack.c.h.b16 %v187
    %v336 = vunpack.c.l.b16 %v188
    %v337 = vunpack.c.h.b16 %v188
    %v338 = vunpack.c.l.b16 %v189
    %v339 = vunpack.c.h.b16 %v189
    %v340 = vunpack.c.l.b16 %v190
    %v341 = vunpack.c.h.b16 %v190
    %v342 = vunpack.c.l.b16 %v191
    %v343 = vunpack.c.h.b16 %v191
    %v344 = vunpack.c.l.b16 %v192
    %v345 = vunpack.c.h.b16 %v192
    %v346 = vunpack.c.l.b16 %v193
    %v347 = vunpack.c.h.b16 %v193
    %v348 = vunpack.c.l.b16 %v194
    %v349 = vunpack.c.h.b16 %v194
    %v350 = vunpack.c.l.b16 %v195
    %v351 = vunpack.c.h.b16 %v195
    %v352 = vunpack.c.l.b16 %v196
    %v353 = vunpack.c.h.b16 %v196
    %v354 = vunpack.c.l.b16 %v197
    %v355 = vunpack.c.h.b16 %v197
    %v356 = vunpack.c.l.b16 %v198
    %v357 = vunpack.c.h.b16 %v198
    %v358 = vunpack.c.l.b16 %v199
    %v359 = vunpack.c.h.b16 %v199
    %v360 = vunpack.c.l.b16 %v200
    %v361 = vunpack.c.h.b16 %v200
    %v362 = vunpack.c.l.b16 %v201
    %v363 = vunpack.c.h.b16 %v201
    %v364 = vunpack.c.l.b16 %v202
    %v365 = vunpack.c.h.b16 %v202
    %v366 = vunpack.c.l.b16 %v203
    %v367 = vunpack.c.h.b16 %v203
    %v368 = vunpack.c.l.b16 %v204
    %v369 = vunpack.c.h.b16 %v204
    %v370 = vunpack.c.l.b16 %v205
    %v371 = vunpack.c.h.b16 %v205
    %v372 = vunpack.c.l.b16 %v206
    %v373 = vunpack.c.h.b16 %v206
    %v374 = vunpack.c.l.b16 %v207
    %v375 = vunpack.c.h.b16 %v207
    %v376 = vunpack.c.l.b16 %v208
    %v377 = vunpack.c.h.b16 %v208
    %v378 = vunpack.c.l.b16 %v209
    %v379 = vunpack.c.h.b16 %v209
    %v380 = vunpack.c.l.b16 %v210
    %v381 = vunpack.c.h.b16 %v210
    %v382 = vunpack.c.l.b16 %v211
    %v383 = vunpack.c.h.b16 %v211
    %v384 = vunpack.c.l.b16 %v212
    %v385 = vunpack.c.h.b16 %v212
    %v386 = vunpack.c.l.b16 %v213
    %v387 = vunpack.c.h.b16 %v213
    %v388 = vunpack.c.l.b16 %v214
    %v389 = vunpack.c.h.b16 %v214
    %v390 = vunpack.c.l.b16 %v215
    %v391 = vunpack.c.h.b16 %v215
    %v392 = vunpack.c.l.b16 %v216
    %v393 = vunpack.c.h.b16 %v216
    %v394 = vunpack.c.l.b16 %v217
    %v395 = vunpack.c.h.b16 %v217
    %v396 = vunpack.c.l.b16 %v218
    %v397 = vunpack.c.h.b16 %v218
    %v398 = vunpack.c.l.b16 %v219
    %v399 = vunpack.c.h.b16 %v219
    %v400 = vunpack.c.l.b16 %v220
    %v401 = vunpack.c.h.b16 %v220
    %v402 = vunpack.c.l.b16 %v221
    %v403 = vunpack.c.h.b16 %v221
    %v404 = vunpack.c.l.b16 %v222
    %v405 = vunpack.c.h.b16 %v222
    %v406 = vunpack.c.l.b16 %v223
    %v407 = vunpack.c.h.b16 %v223
    %v408 = vunpack.c.l.b16 %v224
    %v409 = vunpack.c.h.b16 %v224
    %v410 = vunpack.c.l.b16 %v225
    %v411 = vunpack.c.h.b16 %v225
    %v412 = vunpack.c.l.b16 %v226
    %v413 = vunpack.c.h.b16 %v226
    %v414 = vunpack.c.l.b16 %v227
    %v415 = vunpack.c.h.b16 %v227
    %v416 = vunpack.c.l.b16 %v228
    %v417 = vunpack.c.h.b16 %v228
    %v418 = vunpack.c.l.b16 %v229
    %v419 = vunpack.c.h.b16 %v229
    %v420 = vunpack.c.l.b16 %v230
    %v421 = vunpack.c.h.b16 %v230
    %v422 = vunpack.c.l.b16 %v231
    %v423 = vunpack.c.h.b16 %v231
    %v424 = vunpack.c.l.b16 %v232
    %v425 = vunpack.c.h.b16 %v232
    %v426 = vunpack.c.l.b16 %v233
    %v427 = vunpack.c.h.b16 %v233
    %v428 = vunpack.c.l.b16 %v234
    %v429 = vunpack.c.h.b16 %v234
    %v430 = vunpack.c.l.b16 %v235
    %v431 = vunpack.c.h.b16 %v235
    %v432 = vunpack.c.l.b16 %v236
    %v433 = vunpack.c.h.b16 %v236
    %v434 = vunpack.c.l.b16 %v237
    %v435 = vunpack.c.h.b16 %v237
    %v436 = vunpack.c.l.b16 %v238
    %v437 = vunpack.c.h.b16 %v238
    %v438 = vunpack.c.l.b16 %v239
    %v439 = vunpack.c.h.b16 %v239
    %v440 = vunpack.c.l.b16 %v240
    %v441 = vunpack.c.h.b16 %v240
    %v442 = vunpack.c.l.b16 %v241
    %v443 = vunpack.c.h.b16 %v241
    %v444 = vunpack.c.l.b16 %v242
    %v445 = vunpack.c.h.b16 %v242
    %v446 = vunpack.c.l.b16 %v243
    %v447 = vunpack.c.h.b16 %v243
    %v448 = vpack.c.b16 %v322, %v320
    %v449 = vpack.c.b16 %v323, %v321
    %v450 = vpack.c.b16 %v326, %v324
    %v451 = vpack.c.b16 %v327, %v325
    %v452 = vpack.c.b16 %v330, %v328
    %v453 = vpack.c.b16 %v331, %v329
    %v454 = vpack.c.b16 %v334, %v332
    %v455 = vpack.c.b16 %v335, %v333
    %v456 = vpack.c.b16 %v338, %v336
    %v457 = vpack.c.b16 %v339, %v337
    %v458 = vpack.c.b16 %v342, %v340
    %v459 = vpack.c.b16 %v343, %v341
    %v460 = vpack.c.b16 %v346, %v344
    %v461 = vpack.c.b16 %v347, %v345
    %v462 = vpack.c.b16 %v350, %v348
    %v463 = vpack.c.b16 %v351, %v349
    %v464 = vpack.c.b16 %v354, %v352
    %v465 = vpack.c.b16 %v355, %v353
    %v466 = vpack.c.b16 %v358, %v356
    %v467 = vpack.c.b16 %v359, %v357
    %v468 = vpack.c.b16 %v362, %v360
    %v469 = vpack.c.b16 %v363, %v361
    %v470 = vpack.c.b16 %v366, %v364
    %v471 = vpack.c.b16 %v367, %v365
    %v472 = vpack.c.b16 %v370, %v368
    %v473 = vpack.c.b16 %v371, %v369
    %v474 = vpack.c.b16 %v374, %v372
    %v475 = vpack.c.b16 %v375, %v373
    %v476 = vpack.c.b16 %v378, %v376
    %v477 = vpack.c.b16 %v379, %v377
    %v478 = vpack.c.b16 %v382, %v380
    %v479 = vpack.c.b16 %v383, %v381
    %v480 = vpack.c.b16 %v386, %v384
    %v481 = vpack.c.b16 %v387, %v385
    %v482 = vpack.c.b16 %v390, %v388
    %v483 = vpack.c.b16 %v391, %v389
    %v484 = vpack.c.b16 %v394, %v392
    %v485 = vpack.c.b16 %v395, %v393
    %v486 = vpack.c.b16 %v398, %v396
    %v487 = vpack.c.b16 %v399, %v397
    %v488 = vpack.c.b16 %v402, %v400
    %v489 = vpack.c.b16 %v403, %v401
    %v490 = vpack.c.b16 %v406, %v404
    %v491 = vpack.c.b16 %v407, %v405
    %v492 = vpack.c.b16 %v410, %v408
    %v493 = vpack.c.b16 %v411, %v409
    %v494 = vpack.c.b16 %v414, %v412
    %v495 = vpack.c.b16 %v415, %v413
    %v496 = vpack.c.b16 %v418, %v416
    %v497 = vpack.c.b16 %v419, %v417
    %v498 = vpack.c.b16 %v422, %v420
    %v499 = vpack.c.b16 %v423, %v421
    %v500 = vpack.c.b16 %v426, %v424
    %v501 = vpack.c.b16 %v427, %v425
    %v502 = vpack.c.b16 %v430, %v428
    %v503 = vpack.c.b16 %v431, %v429
    %v504 = vpack.c.b16 %v434, %v432
    %v505 = vpack.c.b16 %v435, %v433
    %v506 = vpack.c.b16 %v438, %v436
    %v507 = vpack.c.b16 %v439, %v437
    %v508 = vpack.c.b16 %v442, %v440
    %v509 = vpack.c.b16 %v443, %v441
    %v510 = vpack.c.b16 %v446, %v444
    %v511 = vpack.c.b16 %v447, %v445
    %576 = vmatprep.subr.bf16.mxu0 %v449
    %577 = vmatpush1.bf16.msra.mxu0 %v448
    %578 = vmatprep.subr.bf16.mxu0 %v451
    %579 = vmatpush1.bf16.msra.mxu0 %v450
    %580 = vmatprep.subr.bf16.mxu0 %v453
    %581 = vmatpush1.bf16.msra.mxu0 %v452
    %582 = vmatprep.subr.bf16.mxu0 %v455
    %583 = vmatpush1.bf16.msra.mxu0 %v454
    %584 = vmatprep.subr.bf16.mxu0 %v457
    %585 = vmatpush1.bf16.msra.mxu0 %v456
    %586 = vmatprep.subr.bf16.mxu0 %v459
    %587 = vmatpush1.bf16.msra.mxu0 %v458
    %588 = vmatprep.subr.bf16.mxu0 %v461
    %589 = vmatpush1.bf16.msra.mxu0 %v460
    %590 = vmatprep.subr.bf16.mxu0 %v463
    %591 = vmatpush1.bf16.msra.mxu0 %v462
    %592 = vmatprep.subr.bf16.mxu0 %v465
    %593 = vmatpush1.bf16.msra.mxu0 %v464
    %594 = vmatprep.subr.bf16.mxu0 %v467
    %595 = vmatpush1.bf16.msra.mxu0 %v466
    %596 = vmatprep.subr.bf16.mxu0 %v469
    %597 = vmatpush1.bf16.msra.mxu0 %v468
    %598 = vmatprep.subr.bf16.mxu0 %v471
    %599 = vmatpush1.bf16.msra.mxu0 %v470
    %600 = vmatprep.subr.bf16.mxu0 %v473
    %601 = vmatpush1.bf16.msra.mxu0 %v472
    %602 = vmatprep.subr.bf16.mxu0 %v475
    %603 = vmatpush1.bf16.msra.mxu0 %v474
    %604 = vmatprep.subr.bf16.mxu0 %v477
    %605 = vmatpush1.bf16.msra.mxu0 %v476
    %606 = vmatprep.subr.bf16.mxu0 %v479
    %607 = vmatpush1.bf16.msra.mxu0 %v478
    %608 = vmatprep.mubr.bf16.mxu0 %v165
    %609 = vmatmul.mubr.bf16.gmra.mrb[0].mxu0 %v164
    %v610 = vpop.f32.mrb[0].mxu0
    %v611 = vadd.f32 %v249, %v610
    %v612 = vpop.f32.mrb[0].mxu0
    %v613 = vadd.f32 %v253, %v612
    %v614 = vpop.f32.mrb[0].mxu0
    %v615 = vadd.f32 %v249, %v614
    %v616 = vpop.f32.mrb[0].mxu0
    %v617 = vadd.f32 %v253, %v616
    %618 = vdwg.mxu0
    %619 = vmatprep.subr.bf16.mxu0 %v481
    %620 = vmatpush1.bf16.msra.mxu0 %v480
    %621 = vmatprep.subr.bf16.mxu0 %v483
    %622 = vmatpush1.bf16.msra.mxu0 %v482
    %623 = vmatprep.subr.bf16.mxu0 %v485
    %624 = vmatpush1.bf16.msra.mxu0 %v484
    %625 = vmatprep.subr.bf16.mxu0 %v487
    %626 = vmatpush1.bf16.msra.mxu0 %v486
    %627 = vmatprep.subr.bf16.mxu0 %v489
    %628 = vmatpush1.bf16.msra.mxu0 %v488
    %629 = vmatprep.subr.bf16.mxu0 %v491
    %630 = vmatpush1.bf16.msra.mxu0 %v490
    %631 = vmatprep.subr.bf16.mxu0 %v493
    %632 = vmatpush1.bf16.msra.mxu0 %v492
    %633 = vmatprep.subr.bf16.mxu0 %v495
    %634 = vmatpush1.bf16.msra.mxu0 %v494
    %635 = vmatprep.subr.bf16.mxu0 %v497
    %636 = vmatpush1.bf16.msra.mxu0 %v496
    %637 = vmatprep.subr.bf16.mxu0 %v499
    %638 = vmatpush1.bf16.msra.mxu0 %v498
    %639 = vmatprep.subr.bf16.mxu0 %v501
    %640 = vmatpush1.bf16.msra.mxu0 %v500
    %641 = vmatprep.subr.bf16.mxu0 %v503
    %642 = vmatpush1.bf16.msra.mxu0 %v502
    %643 = vmatprep.subr.bf16.mxu0 %v505
    %644 = vmatpush1.bf16.msra.mxu0 %v504
    %645 = vmatprep.subr.bf16.mxu0 %v507
    %646 = vmatpush1.bf16.msra.mxu0 %v506
    %647 = vmatprep.subr.bf16.mxu0 %v509
    %648 = vmatpush1.bf16.msra.mxu0 %v508
    %649 = vmatprep.subr.bf16.mxu0 %v511
    %650 = vmatpush1.bf16.msra.mxu0 %v510
    %651 = vmatprep.mubr.bf16.mxu0 %v167
    %652 = vmatmul.mubr.bf16.gmra.mrb[0].mxu0 %v166
    %v653 = vpop.f32.mrb[0].mxu0
    %v654 = vadd.f32 %v611, %v653
    %v655 = vpop.f32.mrb[0].mxu0
    %v656 = vadd.f32 %v613, %v655
    %v657 = vpop.f32.mrb[0].mxu0
    %v658 = vadd.f32 %v615, %v657
    %v659 = vpop.f32.mrb[0].mxu0
    %v660 = vadd.f32 %v617, %v659
    %661 = vdwg.mxu0
    %s662 = scalar_lea.vmem [#allocation16], 1
    %v663 = vld [vmem:[%s662] ss:$8 sm:$0x3]
    %s664 = scalar_lea.vmem [#allocation16], 2
    %v665 = vld [vmem:[%s664] ss:$8 sm:$0x3]
    %v666 = vadd.f32 %v654, %v656
    %667 = vadd.xlane.f32.xlu0 %v666
    %v668 = vpop.xlane.xlu0 %667
    %v669 = vadd.f32 %v658, %v660
    %670 = vadd.xlane.f32.xlu0 %v669
    %v671 = vpop.xlane.xlu0 %670
    %v672 = vmul.f32 %v654, %v654
    %v673 = vmul.f32 %v656, %v656
    %v674 = vmul.f32 %v658, %v658
    %v675 = vmul.f32 %v660, %v660
    %v676 = vadd.f32 %v672, %v673
    %677 = vadd.xlane.f32.xlu0 %v676
    %v678 = vpop.xlane.xlu0 %677
    %v679 = vadd.f32 %v674, %v675
    %680 = vadd.xlane.f32.xlu0 %v679
    %v681 = vpop.xlane.xlu0 %680
    %v682 = vmul.f32 %v668, 0.00390625
    %v683 = vmul.f32 %v671, 0.00390625
    %v684 = vmul.f32 %v678, 0.00390625
    %v685 = vmul.f32 %v681, 0.00390625
    %v686 = vmul.f32 %v682, %v682
    %v687 = vmul.f32 %v683, %v683
    %v688 = vsub.f32 %v684, %v686
    %v689 = vsub.f32 %v685, %v687
    %v690 = vmax.f32 %v688, 0.0
    %v691 = vmax.f32 %v689, 0.0
    %v692 = vadd.f32 %v690, 1e-05
    %v693 = vadd.f32 %v691, 1e-05
    %v694 = vrsqrt.pop %v692
    %v695 = vrsqrt.pop %v693
    %v696 = vsub.f32 %v654, %v682
    %v697 = vsub.f32 %v656, %v682
    %v698 = vsub.f32 %v658, %v683
    %v699 = vsub.f32 %v660, %v683
    %v700 = vmul.f32 %v696, %v694
    %v701 = vmul.f32 %v697, %v694
    %v702 = vmul.f32 %v698, %v695
    %v703 = vmul.f32 %v699, %v695
    %v704 = vpack.c.bf16 %v702, %v700
    %v705 = vpack.c.bf16 %v703, %v701
    %v707 = vlaneseq
    %v708 = vshrl.u32 %v707, 7
    %v709 = vsub.s32 0, %v708
    %v710 = vrot.slane %v663, %v709
    %v711 = vlaneseq
    %v712 = vshrl.u32 %v711, 7
    %v713 = vsub.s32 1, %v712
    %v714 = vrot.slane %v663, %v713
    %v717 = vpack.c.bf16 %v710, %v710
    %v718 = vpack.c.bf16 %v714, %v714
    %v720 = vpack.i.b16 %v717, %v717
    %v722 = vlaneseq
    %v723 = vshrl.u32 %v722, 7
    %v724 = vsub.s32 0, %v723
    %v725 = vrot.slane %v720, %v724
    %v727 = vpack.i.b16 %v718, %v718
    %v729 = vlaneseq
    %v730 = vshrl.u32 %v729, 7
    %v731 = vsub.s32 0, %v730
    %v732 = vrot.slane %v727, %v731
    %v733 = vmul.bf16 %v704, %v725
    %v734 = vmul.bf16 %v705, %v732
    %v736 = vlaneseq
    %v737 = vshrl.u32 %v736, 7
    %v738 = vsub.s32 0, %v737
    %v739 = vrot.slane %v665, %v738
    %v740 = vlaneseq
    %v741 = vshrl.u32 %v740, 7
    %v742 = vsub.s32 1, %v741
    %v743 = vrot.slane %v665, %v742
    %v746 = vpack.c.bf16 %v739, %v739
    %v747 = vpack.c.bf16 %v743, %v743
    %v749 = vpack.i.b16 %v746, %v746
    %v751 = vlaneseq
    %v752 = vshrl.u32 %v751, 7
    %v753 = vsub.s32 0, %v752
    %v754 = vrot.slane %v749, %v753
    %v756 = vpack.i.b16 %v747, %v747
    %v758 = vlaneseq
    %v759 = vshrl.u32 %v758, 7
    %v760 = vsub.s32 0, %v759
    %v761 = vrot.slane %v756, %v760
    %v762 = vadd.bf16 %v733, %v754
    %v763 = vadd.bf16 %v734, %v761
    %v764 = vmax.bf16 %v762, 0
    %v765 = vmax.bf16 %v763, 0
    %v766 = vld [vmem:[#allocation8] sm:$0xff]
    %v767 = vld [vmem:[#allocation8 + $0x8] sm:$0xff]
    %v768 = vld [vmem:[#allocation8 + $0x10] sm:$0xff]
    %v769 = vld [vmem:[#allocation8 + $0x18] sm:$0xff]
    %v770 = vld [vmem:[#allocation8 + $0x20] sm:$0xff]
    %v771 = vld [vmem:[#allocation8 + $0x28] sm:$0xff]
    %v772 = vld [vmem:[#allocation8 + $0x30] sm:$0xff]
    %v773 = vld [vmem:[#allocation8 + $0x38] sm:$0xff]
    %v774 = vld [vmem:[#allocation8 + $0x40] sm:$0xff]
    %v775 = vld [vmem:[#allocation8 + $0x48] sm:$0xff]
    %v776 = vld [vmem:[#allocation8 + $0x50] sm:$0xff]
    %v777 = vld [vmem:[#allocation8 + $0x58] sm:$0xff]
    %v778 = vld [vmem:[#allocation8 + $0x60] sm:$0xff]
    %v779 = vld [vmem:[#allocation8 + $0x68] sm:$0xff]
    %v780 = vld [vmem:[#allocation8 + $0x70] sm:$0xff]
    %v781 = vld [vmem:[#allocation8 + $0x78] sm:$0xff]
    %v782 = vld [vmem:[#allocation8 + $0x80] sm:$0xff]
    %v783 = vld [vmem:[#allocation8 + $0x88] sm:$0xff]
    %v784 = vld [vmem:[#allocation8 + $0x90] sm:$0xff]
    %v785 = vld [vmem:[#allocation8 + $0x98] sm:$0xff]
    %v786 = vld [vmem:[#allocation8 + $0xa0] sm:$0xff]
    %v787 = vld [vmem:[#allocation8 + $0xa8] sm:$0xff]
    %v788 = vld [vmem:[#allocation8 + $0xb0] sm:$0xff]
    %v789 = vld [vmem:[#allocation8 + $0xb8] sm:$0xff]
    %v790 = vld [vmem:[#allocation8 + $0xc0] sm:$0xff]
    %v791 = vld [vmem:[#allocation8 + $0xc8] sm:$0xff]
    %v792 = vld [vmem:[#allocation8 + $0xd0] sm:$0xff]
    %v793 = vld [vmem:[#allocation8 + $0xd8] sm:$0xff]
    %v794 = vld [vmem:[#allocation8 + $0xe0] sm:$0xff]
    %v795 = vld [vmem:[#allocation8 + $0xe8] sm:$0xff]
    %v796 = vld [vmem:[#allocation8 + $0xf0] sm:$0xff]
    %v797 = vld [vmem:[#allocation8 + $0xf8] sm:$0xff]
    %v798 = vld [vmem:[#allocation8 + $0x100] sm:$0xff]
    %v799 = vld [vmem:[#allocation8 + $0x108] sm:$0xff]
    %v800 = vld [vmem:[#allocation8 + $0x110] sm:$0xff]
    %v801 = vld [vmem:[#allocation8 + $0x118] sm:$0xff]
    %v802 = vld [vmem:[#allocation8 + $0x120] sm:$0xff]
    %v803 = vld [vmem:[#allocation8 + $0x128] sm:$0xff]
    %v804 = vld [vmem:[#allocation8 + $0x130] sm:$0xff]
    %v805 = vld [vmem:[#allocation8 + $0x138] sm:$0xff]
    %v806 = vld [vmem:[#allocation8 + $0x140] sm:$0xff]
    %v807 = vld [vmem:[#allocation8 + $0x148] sm:$0xff]
    %v808 = vld [vmem:[#allocation8 + $0x150] sm:$0xff]
    %v809 = vld [vmem:[#allocation8 + $0x158] sm:$0xff]
    %v810 = vld [vmem:[#allocation8 + $0x160] sm:$0xff]
    %v811 = vld [vmem:[#allocation8 + $0x168] sm:$0xff]
    %v812 = vld [vmem:[#allocation8 + $0x170] sm:$0xff]
    %v813 = vld [vmem:[#allocation8 + $0x178] sm:$0xff]
    %v814 = vld [vmem:[#allocation8 + $0x180] sm:$0xff]
    %v815 = vld [vmem:[#allocation8 + $0x188] sm:$0xff]
    %v816 = vld [vmem:[#allocation8 + $0x190] sm:$0xff]
    %v817 = vld [vmem:[#allocation8 + $0x198] sm:$0xff]
    %v818 = vld [vmem:[#allocation8 + $0x1a0] sm:$0xff]
    %v819 = vld [vmem:[#allocation8 + $0x1a8] sm:$0xff]
    %v820 = vld [vmem:[#allocation8 + $0x1b0] sm:$0xff]
    %v821 = vld [vmem:[#allocation8 + $0x1b8] sm:$0xff]
    %v822 = vld [vmem:[#allocation8 + $0x1c0] sm:$0xff]
    %v823 = vld [vmem:[#allocation8 + $0x1c8] sm:$0xff]
    %v824 = vld [vmem:[#allocation8 + $0x1d0] sm:$0xff]
    %v825 = vld [vmem:[#allocation8 + $0x1d8] sm:$0xff]
    %v826 = vld [vmem:[#allocation8 + $0x1e0] sm:$0xff]
    %v827 = vld [vmem:[#allocation8 + $0x1e8] sm:$0xff]
    %v828 = vld [vmem:[#allocation8 + $0x1f0] sm:$0xff]
    %v829 = vld [vmem:[#allocation8 + $0x1f8] sm:$0xff]
    %s830 = scalar_lea.vmem [#allocation16], 3
    %v831 = vld [vmem:[%s830] ss:$8 sm:$0x3]
    %v833 = vlaneseq
    %v834 = vshrl.u32 %v833, 7
    %v835 = vsub.s32 0, %v834
    %v836 = vrot.slane %v831, %v835
    %v837 = vlaneseq
    %v838 = vshrl.u32 %v837, 7
    %v839 = vsub.s32 1, %v838
    %v840 = vrot.slane %v831, %v839
    %v907 = vunpack.c.l.b16 %v766
    %v908 = vunpack.c.h.b16 %v766
    %v909 = vunpack.c.l.b16 %v767
    %v910 = vunpack.c.h.b16 %v767
    %v911 = vunpack.c.l.b16 %v768
    %v912 = vunpack.c.h.b16 %v768
    %v913 = vunpack.c.l.b16 %v769
    %v914 = vunpack.c.h.b16 %v769
    %v915 = vunpack.c.l.b16 %v770
    %v916 = vunpack.c.h.b16 %v770
    %v917 = vunpack.c.l.b16 %v771
    %v918 = vunpack.c.h.b16 %v771
    %v919 = vunpack.c.l.b16 %v772
    %v920 = vunpack.c.h.b16 %v772
    %v921 = vunpack.c.l.b16 %v773
    %v922 = vunpack.c.h.b16 %v773
    %v923 = vunpack.c.l.b16 %v774
    %v924 = vunpack.c.h.b16 %v774
    %v925 = vunpack.c.l.b16 %v775
    %v926 = vunpack.c.h.b16 %v775
    %v927 = vunpack.c.l.b16 %v776
    %v928 = vunpack.c.h.b16 %v776
    %v929 = vunpack.c.l.b16 %v777
    %v930 = vunpack.c.h.b16 %v777
    %v931 = vunpack.c.l.b16 %v778
    %v932 = vunpack.c.h.b16 %v778
    %v933 = vunpack.c.l.b16 %v779
    %v934 = vunpack.c.h.b16 %v779
    %v935 = vunpack.c.l.b16 %v780
    %v936 = vunpack.c.h.b16 %v780
    %v937 = vunpack.c.l.b16 %v781
    %v938 = vunpack.c.h.b16 %v781
    %v939 = vunpack.c.l.b16 %v782
    %v940 = vunpack.c.h.b16 %v782
    %v941 = vunpack.c.l.b16 %v783
    %v942 = vunpack.c.h.b16 %v783
    %v943 = vunpack.c.l.b16 %v784
    %v944 = vunpack.c.h.b16 %v784
    %v945 = vunpack.c.l.b16 %v785
    %v946 = vunpack.c.h.b16 %v785
    %v947 = vunpack.c.l.b16 %v786
    %v948 = vunpack.c.h.b16 %v786
    %v949 = vunpack.c.l.b16 %v787
    %v950 = vunpack.c.h.b16 %v787
    %v951 = vunpack.c.l.b16 %v788
    %v952 = vunpack.c.h.b16 %v788
    %v953 = vunpack.c.l.b16 %v789
    %v954 = vunpack.c.h.b16 %v789
    %v955 = vunpack.c.l.b16 %v790
    %v956 = vunpack.c.h.b16 %v790
    %v957 = vunpack.c.l.b16 %v791
    %v958 = vunpack.c.h.b16 %v791
    %v959 = vunpack.c.l.b16 %v792
    %v960 = vunpack.c.h.b16 %v792
    %v961 = vunpack.c.l.b16 %v793
    %v962 = vunpack.c.h.b16 %v793
    %v963 = vunpack.c.l.b16 %v794
    %v964 = vunpack.c.h.b16 %v794
    %v965 = vunpack.c.l.b16 %v795
    %v966 = vunpack.c.h.b16 %v795
    %v967 = vunpack.c.l.b16 %v796
    %v968 = vunpack.c.h.b16 %v796
    %v969 = vunpack.c.l.b16 %v797
    %v970 = vunpack.c.h.b16 %v797
    %v971 = vunpack.c.l.b16 %v798
    %v972 = vunpack.c.h.b16 %v798
    %v973 = vunpack.c.l.b16 %v799
    %v974 = vunpack.c.h.b16 %v799
    %v975 = vunpack.c.l.b16 %v800
    %v976 = vunpack.c.h.b16 %v800
    %v977 = vunpack.c.l.b16 %v801
    %v978 = vunpack.c.h.b16 %v801
    %v979 = vunpack.c.l.b16 %v802
    %v980 = vunpack.c.h.b16 %v802
    %v981 = vunpack.c.l.b16 %v803
    %v982 = vunpack.c.h.b16 %v803
    %v983 = vunpack.c.l.b16 %v804
    %v984 = vunpack.c.h.b16 %v804
    %v985 = vunpack.c.l.b16 %v805
    %v986 = vunpack.c.h.b16 %v805
    %v987 = vunpack.c.l.b16 %v806
    %v988 = vunpack.c.h.b16 %v806
    %v989 = vunpack.c.l.b16 %v807
    %v990 = vunpack.c.h.b16 %v807
    %v991 = vunpack.c.l.b16 %v808
    %v992 = vunpack.c.h.b16 %v808
    %v993 = vunpack.c.l.b16 %v809
    %v994 = vunpack.c.h.b16 %v809
    %v995 = vunpack.c.l.b16 %v810
    %v996 = vunpack.c.h.b16 %v810
    %v997 = vunpack.c.l.b16 %v811
    %v998 = vunpack.c.h.b16 %v811
    %v999 = vunpack.c.l.b16 %v812
    %v1000 = vunpack.c.h.b16 %v812
    %v1001 = vunpack.c.l.b16 %v813
    %v1002 = vunpack.c.h.b16 %v813
    %v1003 = vunpack.c.l.b16 %v814
    %v1004 = vunpack.c.h.b16 %v814
    %v1005 = vunpack.c.l.b16 %v815
    %v1006 = vunpack.c.h.b16 %v815
    %v1007 = vunpack.c.l.b16 %v816
    %v1008 = vunpack.c.h.b16 %v816
    %v1009 = vunpack.c.l.b16 %v817
    %v1010 = vunpack.c.h.b16 %v817
    %v1011 = vunpack.c.l.b16 %v818
    %v1012 = vunpack.c.h.b16 %v818
    %v1013 = vunpack.c.l.b16 %v819
    %v1014 = vunpack.c.h.b16 %v819
    %v1015 = vunpack.c.l.b16 %v820
    %v1016 = vunpack.c.h.b16 %v820
    %v1017 = vunpack.c.l.b16 %v821
    %v1018 = vunpack.c.h.b16 %v821
    %v1019 = vunpack.c.l.b16 %v822
    %v1020 = vunpack.c.h.b16 %v822
    %v1021 = vunpack.c.l.b16 %v823
    %v1022 = vunpack.c.h.b16 %v823
    %v1023 = vunpack.c.l.b16 %v824
    %v1024 = vunpack.c.h.b16 %v824
    %v1025 = vunpack.c.l.b16 %v825
    %v1026 = vunpack.c.h.b16 %v825
    %v1027 = vunpack.c.l.b16 %v826
    %v1028 = vunpack.c.h.b16 %v826
    %v1029 = vunpack.c.l.b16 %v827
    %v1030 = vunpack.c.h.b16 %v827
    %v1031 = vunpack.c.l.b16 %v828
    %v1032 = vunpack.c.h.b16 %v828
    %v1033 = vunpack.c.l.b16 %v829
    %v1034 = vunpack.c.h.b16 %v829
    %v1035 = vpack.c.b16 %v909, %v907
    %v1036 = vpack.c.b16 %v910, %v908
    %v1037 = vpack.c.b16 %v913, %v911
    %v1038 = vpack.c.b16 %v914, %v912
    %v1039 = vpack.c.b16 %v917, %v915
    %v1040 = vpack.c.b16 %v918, %v916
    %v1041 = vpack.c.b16 %v921, %v919
    %v1042 = vpack.c.b16 %v922, %v920
    %v1043 = vpack.c.b16 %v925, %v923
    %v1044 = vpack.c.b16 %v926, %v924
    %v1045 = vpack.c.b16 %v929, %v927
    %v1046 = vpack.c.b16 %v930, %v928
    %v1047 = vpack.c.b16 %v933, %v931
    %v1048 = vpack.c.b16 %v934, %v932
    %v1049 = vpack.c.b16 %v937, %v935
    %v1050 = vpack.c.b16 %v938, %v936
    %v1051 = vpack.c.b16 %v941, %v939
    %v1052 = vpack.c.b16 %v942, %v940
    %v1053 = vpack.c.b16 %v945, %v943
    %v1054 = vpack.c.b16 %v946, %v944
    %v1055 = vpack.c.b16 %v949, %v947
    %v1056 = vpack.c.b16 %v950, %v948
    %v1057 = vpack.c.b16 %v953, %v951
    %v1058 = vpack.c.b16 %v954, %v952
    %v1059 = vpack.c.b16 %v957, %v955
    %v1060 = vpack.c.b16 %v958, %v956
    %v1061 = vpack.c.b16 %v961, %v959
    %v1062 = vpack.c.b16 %v962, %v960
    %v1063 = vpack.c.b16 %v965, %v963
    %v1064 = vpack.c.b16 %v966, %v964
    %v1065 = vpack.c.b16 %v969, %v967
    %v1066 = vpack.c.b16 %v970, %v968
    %v1067 = vpack.c.b16 %v973, %v971
    %v1068 = vpack.c.b16 %v974, %v972
    %v1069 = vpack.c.b16 %v977, %v975
    %v1070 = vpack.c.b16 %v978, %v976
    %v1071 = vpack.c.b16 %v981, %v979
    %v1072 = vpack.c.b16 %v982, %v980
    %v1073 = vpack.c.b16 %v985, %v983
    %v1074 = vpack.c.b16 %v986, %v984
    %v1075 = vpack.c.b16 %v989, %v987
    %v1076 = vpack.c.b16 %v990, %v988
    %v1077 = vpack.c.b16 %v993, %v991
    %v1078 = vpack.c.b16 %v994, %v992
    %v1079 = vpack.c.b16 %v997, %v995
    %v1080 = vpack.c.b16 %v998, %v996
    %v1081 = vpack.c.b16 %v1001, %v999
    %v1082 = vpack.c.b16 %v1002, %v1000
    %v1083 = vpack.c.b16 %v1005, %v1003
    %v1084 = vpack.c.b16 %v1006, %v1004
    %v1085 = vpack.c.b16 %v1009, %v1007
    %v1086 = vpack.c.b16 %v1010, %v1008
    %v1087 = vpack.c.b16 %v1013, %v1011
    %v1088 = vpack.c.b16 %v1014, %v1012
    %v1089 = vpack.c.b16 %v1017, %v1015
    %v1090 = vpack.c.b16 %v1018, %v1016
    %v1091 = vpack.c.b16 %v1021, %v1019
    %v1092 = vpack.c.b16 %v1022, %v1020
    %v1093 = vpack.c.b16 %v1025, %v1023
    %v1094 = vpack.c.b16 %v1026, %v1024
    %v1095 = vpack.c.b16 %v1029, %v1027
    %v1096 = vpack.c.b16 %v1030, %v1028
    %v1097 = vpack.c.b16 %v1033, %v1031
    %v1098 = vpack.c.b16 %v1034, %v1032
    %1163 = vmatprep.subr.bf16.mxu0 %v1036
    %1164 = vmatpush1.bf16.msra.mxu0 %v1035
    %1165 = vmatprep.subr.bf16.mxu0 %v1038
    %1166 = vmatpush1.bf16.msra.mxu0 %v1037
    %1167 = vmatprep.subr.bf16.mxu0 %v1040
    %1168 = vmatpush1.bf16.msra.mxu0 %v1039
    %1169 = vmatprep.subr.bf16.mxu0 %v1042
    %1170 = vmatpush1.bf16.msra.mxu0 %v1041
    %1171 = vmatprep.subr.bf16.mxu0 %v1044
    %1172 = vmatpush1.bf16.msra.mxu0 %v1043
    %1173 = vmatprep.subr.bf16.mxu0 %v1046
    %1174 = vmatpush1.bf16.msra.mxu0 %v1045
    %1175 = vmatprep.subr.bf16.mxu0 %v1048
    %1176 = vmatpush1.bf16.msra.mxu0 %v1047
    %1177 = vmatprep.subr.bf16.mxu0 %v1050
    %1178 = vmatpush1.bf16.msra.mxu0 %v1049
    %1179 = vmatprep.subr.bf16.mxu0 %v1052
    %1180 = vmatpush1.bf16.msra.mxu0 %v1051
    %1181 = vmatprep.subr.bf16.mxu0 %v1054
    %1182 = vmatpush1.bf16.msra.mxu0 %v1053
    %1183 = vmatprep.subr.bf16.mxu0 %v1056
    %1184 = vmatpush1.bf16.msra.mxu0 %v1055
    %1185 = vmatprep.subr.bf16.mxu0 %v1058
    %1186 = vmatpush1.bf16.msra.mxu0 %v1057
    %1187 = vmatprep.subr.bf16.mxu0 %v1060
    %1188 = vmatpush1.bf16.msra.mxu0 %v1059
    %1189 = vmatprep.subr.bf16.mxu0 %v1062
    %1190 = vmatpush1.bf16.msra.mxu0 %v1061
    %1191 = vmatprep.subr.bf16.mxu0 %v1064
    %1192 = vmatpush1.bf16.msra.mxu0 %v1063
    %1193 = vmatprep.subr.bf16.mxu0 %v1066
    %1194 = vmatpush1.bf16.msra.mxu0 %v1065
    %1195 = vmatprep.mubr.bf16.mxu0 %v177
    %1196 = vmatmul.mubr.bf16.gmra.mrb[0].mxu0 %v176
    %v1197 = vpop.f32.mrb[0].mxu0
    %v1198 = vadd.f32 %v836, %v1197
    %v1199 = vpop.f32.mrb[0].mxu0
    %v1200 = vadd.f32 %v840, %v1199
    %v1201 = vpop.f32.mrb[0].mxu0
    %v1202 = vadd.f32 %v836, %v1201
    %v1203 = vpop.f32.mrb[0].mxu0
    %v1204 = vadd.f32 %v840, %v1203
    %1205 = vdwg.mxu0
    %1206 = vmatprep.subr.bf16.mxu0 %v1068
    %1207 = vmatpush1.bf16.msra.mxu0 %v1067
    %1208 = vmatprep.subr.bf16.mxu0 %v1070
    %1209 = vmatpush1.bf16.msra.mxu0 %v1069
    %1210 = vmatprep.subr.bf16.mxu0 %v1072
    %1211 = vmatpush1.bf16.msra.mxu0 %v1071
    %1212 = vmatprep.subr.bf16.mxu0 %v1074
    %1213 = vmatpush1.bf16.msra.mxu0 %v1073
    %1214 = vmatprep.subr.bf16.mxu0 %v1076
    %1215 = vmatpush1.bf16.msra.mxu0 %v1075
    %1216 = vmatprep.subr.bf16.mxu0 %v1078
    %1217 = vmatpush1.bf16.msra.mxu0 %v1077
    %1218 = vmatprep.subr.bf16.mxu0 %v1080
    %1219 = vmatpush1.bf16.msra.mxu0 %v1079
    %1220 = vmatprep.subr.bf16.mxu0 %v1082
    %1221 = vmatpush1.bf16.msra.mxu0 %v1081
    %1222 = vmatprep.subr.bf16.mxu0 %v1084
    %1223 = vmatpush1.bf16.msra.mxu0 %v1083
    %1224 = vmatprep.subr.bf16.mxu0 %v1086
    %1225 = vmatpush1.bf16.msra.mxu0 %v1085
    %1226 = vmatprep.subr.bf16.mxu0 %v1088
    %1227 = vmatpush1.bf16.msra.mxu0 %v1087
    %1228 = vmatprep.subr.bf16.mxu0 %v1090
    %1229 = vmatpush1.bf16.msra.mxu0 %v1089
    %1230 = vmatprep.subr.bf16.mxu0 %v1092
    %1231 = vmatpush1.bf16.msra.mxu0 %v1091
    %1232 = vmatprep.subr.bf16.mxu0 %v1094
    %1233 = vmatpush1.bf16.msra.mxu0 %v1093
    %1234 = vmatprep.subr.bf16.mxu0 %v1096
    %1235 = vmatpush1.bf16.msra.mxu0 %v1095
    %1236 = vmatprep.subr.bf16.mxu0 %v1098
    %1237 = vmatpush1.bf16.msra.mxu0 %v1097
    %1238 = vmatprep.mubr.bf16.mxu0 %v179
    %1239 = vmatmul.mubr.bf16.gmra.mrb[0].mxu0 %v178
    %v1240 = vpop.f32.mrb[0].mxu0
    %v1241 = vadd.f32 %v1198, %v1240
    %v1242 = vpop.f32.mrb[0].mxu0
    %v1243 = vadd.f32 %v1200, %v1242
    %v1244 = vpop.f32.mrb[0].mxu0
    %v1245 = vadd.f32 %v1202, %v1244
    %v1246 = vpop.f32.mrb[0].mxu0
    %v1247 = vadd.f32 %v1204, %v1246
    %1248 = vdwg.mxu0
    %s1249 = scalar_lea.vmem [#allocation16], 4
    %v1250 = vld [vmem:[%s1249] ss:$8 sm:$0x3]
    %s1251 = scalar_lea.vmem [#allocation16], 5
    %v1252 = vld [vmem:[%s1251] ss:$8 sm:$0x3]
    %v1253 = vadd.f32 %v1241, %v1243
    %1254 = vadd.xlane.f32.xlu0 %v1253
    %v1255 = vpop.xlane.xlu0 %1254
    %v1256 = vadd.f32 %v1245, %v1247
    %1257 = vadd.xlane.f32.xlu0 %v1256
    %v1258 = vpop.xlane.xlu0 %1257
    %v1259 = vmul.f32 %v1241, %v1241
    %v1260 = vmul.f32 %v1243, %v1243
    %v1261 = vmul.f32 %v1245, %v1245
    %v1262 = vmul.f32 %v1247, %v1247
    %v1263 = vadd.f32 %v1259, %v1260
    %1264 = vadd.xlane.f32.xlu0 %v1263
    %v1265 = vpop.xlane.xlu0 %1264
    %v1266 = vadd.f32 %v1261, %v1262
    %1267 = vadd.xlane.f32.xlu0 %v1266
    %v1268 = vpop.xlane.xlu0 %1267
    %v1269 = vmul.f32 %v1255, 0.00390625
    %v1270 = vmul.f32 %v1258, 0.00390625
    %v1271 = vmul.f32 %v1265, 0.00390625
    %v1272 = vmul.f32 %v1268, 0.00390625
    %v1273 = vmul.f32 %v1269, %v1269
    %v1274 = vmul.f32 %v1270, %v1270
    %v1275 = vsub.f32 %v1271, %v1273
    %v1276 = vsub.f32 %v1272, %v1274
    %v1277 = vmax.f32 %v1275, 0.0
    %v1278 = vmax.f32 %v1276, 0.0
    %v1279 = vadd.f32 %v1277, 1e-05
    %v1280 = vadd.f32 %v1278, 1e-05
    %v1281 = vrsqrt.pop %v1279
    %v1282 = vrsqrt.pop %v1280
    %v1283 = vsub.f32 %v1241, %v1269
    %v1284 = vsub.f32 %v1243, %v1269
    %v1285 = vsub.f32 %v1245, %v1270
    %v1286 = vsub.f32 %v1247, %v1270
    %v1287 = vmul.f32 %v1283, %v1281
    %v1288 = vmul.f32 %v1284, %v1281
    %v1289 = vmul.f32 %v1285, %v1282
    %v1290 = vmul.f32 %v1286, %v1282
    %v1291 = vpack.c.bf16 %v1289, %v1287
    %v1292 = vpack.c.bf16 %v1290, %v1288
    %v1294 = vlaneseq
    %v1295 = vshrl.u32 %v1294, 7
    %v1296 = vsub.s32 0, %v1295
    %v1297 = vrot.slane %v1250, %v1296
    %v1298 = vlaneseq
    %v1299 = vshrl.u32 %v1298, 7
    %v1300 = vsub.s32 1, %v1299
    %v1301 = vrot.slane %v1250, %v1300
    %v1304 = vpack.c.bf16 %v1297, %v1297
    %v1305 = vpack.c.bf16 %v1301, %v1301
    %v1307 = vpack.i.b16 %v1304, %v1304
    %v1309 = vlaneseq
    %v1310 = vshrl.u32 %v1309, 7
    %v1311 = vsub.s32 0, %v1310
    %v1312 = vrot.slane %v1307, %v1311
    %v1314 = vpack.i.b16 %v1305, %v1305
    %v1316 = vlaneseq
    %v1317 = vshrl.u32 %v1316, 7
    %v1318 = vsub.s32 0, %v1317
    %v1319 = vrot.slane %v1314, %v1318
    %v1320 = vmul.bf16 %v1291, %v1312
    %v1321 = vmul.bf16 %v1292, %v1319
    %v1323 = vlaneseq
    %v1324 = vshrl.u32 %v1323, 7
    %v1325 = vsub.s32 0, %v1324
    %v1326 = vrot.slane %v1252, %v1325
    %v1327 = vlaneseq
    %v1328 = vshrl.u32 %v1327, 7
    %v1329 = vsub.s32 1, %v1328
    %v1330 = vrot.slane %v1252, %v1329
    %v1333 = vpack.c.bf16 %v1326, %v1326
    %v1334 = vpack.c.bf16 %v1330, %v1330
    %v1336 = vpack.i.b16 %v1333, %v1333
    %v1338 = vlaneseq
    %v1339 = vshrl.u32 %v1338, 7
    %v1340 = vsub.s32 0, %v1339
    %v1341 = vrot.slane %v1336, %v1340
    %v1343 = vpack.i.b16 %v1334, %v1334
    %v1345 = vlaneseq
    %v1346 = vshrl.u32 %v1345, 7
    %v1347 = vsub.s32 0, %v1346
    %v1348 = vrot.slane %v1343, %v1347
    %v1349 = vadd.bf16 %v1320, %v1341
    %v1350 = vadd.bf16 %v1321, %v1348
    %v1351 = vmax.bf16 %v1349, 0
    %v1352 = vmax.bf16 %v1350, 0
    %v1353 = vld [vmem:[#allocation10] sm:$0xff]
    %v1354 = vld [vmem:[#allocation10 + $0x8] sm:$0xff]
    %v1355 = vld [vmem:[#allocation10 + $0x10] sm:$0xff]
    %v1356 = vld [vmem:[#allocation10 + $0x18] sm:$0xff]
    %v1357 = vld [vmem:[#allocation10 + $0x20] sm:$0xff]
    %v1358 = vld [vmem:[#allocation10 + $0x28] sm:$0xff]
    %v1359 = vld [vmem:[#allocation10 + $0x30] sm:$0xff]
    %v1360 = vld [vmem:[#allocation10 + $0x38] sm:$0xff]
    %v1361 = vld [vmem:[#allocation10 + $0x40] sm:$0xff]
    %v1362 = vld [vmem:[#allocation10 + $0x48] sm:$0xff]
    %v1363 = vld [vmem:[#allocation10 + $0x50] sm:$0xff]
    %v1364 = vld [vmem:[#allocation10 + $0x58] sm:$0xff]
    %v1365 = vld [vmem:[#allocation10 + $0x60] sm:$0xff]
    %v1366 = vld [vmem:[#allocation10 + $0x68] sm:$0xff]
    %v1367 = vld [vmem:[#allocation10 + $0x70] sm:$0xff]
    %v1368 = vld [vmem:[#allocation10 + $0x78] sm:$0xff]
    %v1369 = vld [vmem:[#allocation10 + $0x80] sm:$0xff]
    %v1370 = vld [vmem:[#allocation10 + $0x88] sm:$0xff]
    %v1371 = vld [vmem:[#allocation10 + $0x90] sm:$0xff]
    %v1372 = vld [vmem:[#allocation10 + $0x98] sm:$0xff]
    %v1373 = vld [vmem:[#allocation10 + $0xa0] sm:$0xff]
    %v1374 = vld [vmem:[#allocation10 + $0xa8] sm:$0xff]
    %v1375 = vld [vmem:[#allocation10 + $0xb0] sm:$0xff]
    %v1376 = vld [vmem:[#allocation10 + $0xb8] sm:$0xff]
    %v1377 = vld [vmem:[#allocation10 + $0xc0] sm:$0xff]
    %v1378 = vld [vmem:[#allocation10 + $0xc8] sm:$0xff]
    %v1379 = vld [vmem:[#allocation10 + $0xd0] sm:$0xff]
    %v1380 = vld [vmem:[#allocation10 + $0xd8] sm:$0xff]
    %v1381 = vld [vmem:[#allocation10 + $0xe0] sm:$0xff]
    %v1382 = vld [vmem:[#allocation10 + $0xe8] sm:$0xff]
    %v1383 = vld [vmem:[#allocation10 + $0xf0] sm:$0xff]
    %v1384 = vld [vmem:[#allocation10 + $0xf8] sm:$0xff]
    %v1385 = vld [vmem:[#allocation11] sm:$0xff]
    %v1386 = vld [vmem:[#allocation11 + $0x8] sm:$0xff]
    %v1387 = vld [vmem:[#allocation11 + $0x10] sm:$0xff]
    %v1388 = vld [vmem:[#allocation11 + $0x18] sm:$0xff]
    %v1389 = vld [vmem:[#allocation11 + $0x20] sm:$0xff]
    %v1390 = vld [vmem:[#allocation11 + $0x28] sm:$0xff]
    %v1391 = vld [vmem:[#allocation11 + $0x30] sm:$0xff]
    %v1392 = vld [vmem:[#allocation11 + $0x38] sm:$0xff]
    %v1393 = vld [vmem:[#allocation11 + $0x40] sm:$0xff]
    %v1394 = vld [vmem:[#allocation11 + $0x48] sm:$0xff]
    %v1395 = vld [vmem:[#allocation11 + $0x50] sm:$0xff]
    %v1396 = vld [vmem:[#allocation11 + $0x58] sm:$0xff]
    %v1397 = vld [vmem:[#allocation11 + $0x60] sm:$0xff]
    %v1398 = vld [vmem:[#allocation11 + $0x68] sm:$0xff]
    %v1399 = vld [vmem:[#allocation11 + $0x70] sm:$0xff]
    %v1400 = vld [vmem:[#allocation11 + $0x78] sm:$0xff]
    %v1401 = vld [vmem:[#allocation11 + $0x80] sm:$0xff]
    %v1402 = vld [vmem:[#allocation11 + $0x88] sm:$0xff]
    %v1403 = vld [vmem:[#allocation11 + $0x90] sm:$0xff]
    %v1404 = vld [vmem:[#allocation11 + $0x98] sm:$0xff]
    %v1405 = vld [vmem:[#allocation11 + $0xa0] sm:$0xff]
    %v1406 = vld [vmem:[#allocation11 + $0xa8] sm:$0xff]
    %v1407 = vld [vmem:[#allocation11 + $0xb0] sm:$0xff]
    %v1408 = vld [vmem:[#allocation11 + $0xb8] sm:$0xff]
    %v1409 = vld [vmem:[#allocation11 + $0xc0] sm:$0xff]
    %v1410 = vld [vmem:[#allocation11 + $0xc8] sm:$0xff]
    %v1411 = vld [vmem:[#allocation11 + $0xd0] sm:$0xff]
    %v1412 = vld [vmem:[#allocation11 + $0xd8] sm:$0xff]
    %v1413 = vld [vmem:[#allocation11 + $0xe0] sm:$0xff]
    %v1414 = vld [vmem:[#allocation11 + $0xe8] sm:$0xff]
    %v1415 = vld [vmem:[#allocation11 + $0xf0] sm:$0xff]
    %v1416 = vld [vmem:[#allocation11 + $0xf8] sm:$0xff]
    %v1449 = vunpack.c.l.b16 %v1385
    %v1450 = vunpack.c.h.b16 %v1385
    %v1451 = vunpack.c.l.b16 %v1386
    %v1452 = vunpack.c.h.b16 %v1386
    %v1453 = vunpack.c.l.b16 %v1387
    %v1454 = vunpack.c.h.b16 %v1387
    %v1455 = vunpack.c.l.b16 %v1388
    %v1456 = vunpack.c.h.b16 %v1388
    %v1457 = vunpack.c.l.b16 %v1389
    %v1458 = vunpack.c.h.b16 %v1389
    %v1459 = vunpack.c.l.b16 %v1390
    %v1460 = vunpack.c.h.b16 %v1390
    %v1461 = vunpack.c.l.b16 %v1391
    %v1462 = vunpack.c.h.b16 %v1391
    %v1463 = vunpack.c.l.b16 %v1392
    %v1464 = vunpack.c.h.b16 %v1392
    %v1465 = vunpack.c.l.b16 %v1393
    %v1466 = vunpack.c.h.b16 %v1393
    %v1467 = vunpack.c.l.b16 %v1394
    %v1468 = vunpack.c.h.b16 %v1394
    %v1469 = vunpack.c.l.b16 %v1395
    %v1470 = vunpack.c.h.b16 %v1395
    %v1471 = vunpack.c.l.b16 %v1396
    %v1472 = vunpack.c.h.b16 %v1396
    %v1473 = vunpack.c.l.b16 %v1397
    %v1474 = vunpack.c.h.b16 %v1397
    %v1475 = vunpack.c.l.b16 %v1398
    %v1476 = vunpack.c.h.b16 %v1398
    %v1477 = vunpack.c.l.b16 %v1399
    %v1478 = vunpack.c.h.b16 %v1399
    %v1479 = vunpack.c.l.b16 %v1400
    %v1480 = vunpack.c.h.b16 %v1400
    %v1481 = vunpack.c.l.b16 %v1401
    %v1482 = vunpack.c.h.b16 %v1401
    %v1483 = vunpack.c.l.b16 %v1402
    %v1484 = vunpack.c.h.b16 %v1402
    %v1485 = vunpack.c.l.b16 %v1403
    %v1486 = vunpack.c.h.b16 %v1403
    %v1487 = vunpack.c.l.b16 %v1404
    %v1488 = vunpack.c.h.b16 %v1404
    %v1489 = vunpack.c.l.b16 %v1405
    %v1490 = vunpack.c.h.b16 %v1405
    %v1491 = vunpack.c.l.b16 %v1406
    %v1492 = vunpack.c.h.b16 %v1406
    %v1493 = vunpack.c.l.b16 %v1407
    %v1494 = vunpack.c.h.b16 %v1407
    %v1495 = vunpack.c.l.b16 %v1408
    %v1496 = vunpack.c.h.b16 %v1408
    %v1497 = vunpack.c.l.b16 %v1409
    %v1498 = vunpack.c.h.b16 %v1409
    %v1499 = vunpack.c.l.b16 %v1410
    %v1500 = vunpack.c.h.b16 %v1410
    %v1501 = vunpack.c.l.b16 %v1411
    %v1502 = vunpack.c.h.b16 %v1411
    %v1503 = vunpack.c.l.b16 %v1412
    %v1504 = vunpack.c.h.b16 %v1412
    %v1505 = vunpack.c.l.b16 %v1413
    %v1506 = vunpack.c.h.b16 %v1413
    %v1507 = vunpack.c.l.b16 %v1414
    %v1508 = vunpack.c.h.b16 %v1414
    %v1509 = vunpack.c.l.b16 %v1415
    %v1510 = vunpack.c.h.b16 %v1415
    %v1511 = vunpack.c.l.b16 %v1416
    %v1512 = vunpack.c.h.b16 %v1416
    %v1513 = vpack.c.b16 %v1451, %v1449
    %v1514 = vpack.c.b16 %v1452, %v1450
    %v1515 = vpack.c.b16 %v1455, %v1453
    %v1516 = vpack.c.b16 %v1456, %v1454
    %v1517 = vpack.c.b16 %v1459, %v1457
    %v1518 = vpack.c.b16 %v1460, %v1458
    %v1519 = vpack.c.b16 %v1463, %v1461
    %v1520 = vpack.c.b16 %v1464, %v1462
    %v1521 = vpack.c.b16 %v1467, %v1465
    %v1522 = vpack.c.b16 %v1468, %v1466
    %v1523 = vpack.c.b16 %v1471, %v1469
    %v1524 = vpack.c.b16 %v1472, %v1470
    %v1525 = vpack.c.b16 %v1475, %v1473
    %v1526 = vpack.c.b16 %v1476, %v1474
    %v1527 = vpack.c.b16 %v1479, %v1477
    %v1528 = vpack.c.b16 %v1480, %v1478
    %v1529 = vpack.c.b16 %v1483, %v1481
    %v1530 = vpack.c.b16 %v1484, %v1482
    %v1531 = vpack.c.b16 %v1487, %v1485
    %v1532 = vpack.c.b16 %v1488, %v1486
    %v1533 = vpack.c.b16 %v1491, %v1489
    %v1534 = vpack.c.b16 %v1492, %v1490
    %v1535 = vpack.c.b16 %v1495, %v1493
    %v1536 = vpack.c.b16 %v1496, %v1494
    %v1537 = vpack.c.b16 %v1499, %v1497
    %v1538 = vpack.c.b16 %v1500, %v1498
    %v1539 = vpack.c.b16 %v1503, %v1501
    %v1540 = vpack.c.b16 %v1504, %v1502
    %v1541 = vpack.c.b16 %v1507, %v1505
    %v1542 = vpack.c.b16 %v1508, %v1506
    %v1543 = vpack.c.b16 %v1511, %v1509
    %v1544 = vpack.c.b16 %v1512, %v1510
    %1577 = vmatprep.subr.bf16.mxu0 %v1514
    %1578 = vmatpush1.bf16.msra.mxu0 %v1513
    %1579 = vmatprep.subr.bf16.mxu0 %v1516
    %1580 = vmatpush1.bf16.msra.mxu0 %v1515
    %1581 = vmatprep.subr.bf16.mxu0 %v1518
    %1582 = vmatpush1.bf16.msra.mxu0 %v1517
    %1583 = vmatprep.subr.bf16.mxu0 %v1520
    %1584 = vmatpush1.bf16.msra.mxu0 %v1519
    %1585 = vmatprep.subr.bf16.mxu0 %v1522
    %1586 = vmatpush1.bf16.msra.mxu0 %v1521
    %1587 = vmatprep.subr.bf16.mxu0 %v1524
    %1588 = vmatpush1.bf16.msra.mxu0 %v1523
    %1589 = vmatprep.subr.bf16.mxu0 %v1526
    %1590 = vmatpush1.bf16.msra.mxu0 %v1525
    %1591 = vmatprep.subr.bf16.mxu0 %v1528
    %1592 = vmatpush1.bf16.msra.mxu0 %v1527
    %1593 = vmatprep.subr.bf16.mxu0 %v1530
    %1594 = vmatpush1.bf16.msra.mxu0 %v1529
    %1595 = vmatprep.subr.bf16.mxu0 %v1532
    %1596 = vmatpush1.bf16.msra.mxu0 %v1531
    %1597 = vmatprep.subr.bf16.mxu0 %v1534
    %1598 = vmatpush1.bf16.msra.mxu0 %v1533
    %1599 = vmatprep.subr.bf16.mxu0 %v1536
    %1600 = vmatpush1.bf16.msra.mxu0 %v1535
    %1601 = vmatprep.subr.bf16.mxu0 %v1538
    %1602 = vmatpush1.bf16.msra.mxu0 %v1537
    %1603 = vmatprep.subr.bf16.mxu0 %v1540
    %1604 = vmatpush1.bf16.msra.mxu0 %v1539
    %1605 = vmatprep.subr.bf16.mxu0 %v1542
    %1606 = vmatpush1.bf16.msra.mxu0 %v1541
    %1607 = vmatprep.subr.bf16.mxu0 %v1544
    %1608 = vmatpush1.bf16.msra.mxu0 %v1543
    %1609 = vmatprep.mubr.bf16.mxu0 %v1352
    %1610 = vmatmul.mubr.bf16.gmra.mrb[0].mxu0 %v1351
    %v1611 = vpop.f32.mrb[0].mxu0
    %v1612 = vadd.f32 0.0, %v1611
    %v1613 = vpop.f32.mrb[0].mxu0
    %v1614 = vadd.f32 0.0, %v1613
    %v1615 = vpop.f32.mrb[0].mxu0
    %v1616 = vadd.f32 0.0, %v1615
    %v1617 = vpop.f32.mrb[0].mxu0
    %v1618 = vadd.f32 0.0, %v1617
    %1619 = vdwg.mxu0
    %v1652 = vunpack.c.l.b16 %v1353
    %v1653 = vunpack.c.h.b16 %v1353
    %v1654 = vunpack.c.l.b16 %v1354
    %v1655 = vunpack.c.h.b16 %v1354
    %v1656 = vunpack.c.l.b16 %v1355
    %v1657 = vunpack.c.h.b16 %v1355
    %v1658 = vunpack.c.l.b16 %v1356
    %v1659 = vunpack.c.h.b16 %v1356
    %v1660 = vunpack.c.l.b16 %v1357
    %v1661 = vunpack.c.h.b16 %v1357
    %v1662 = vunpack.c.l.b16 %v1358
    %v1663 = vunpack.c.h.b16 %v1358
    %v1664 = vunpack.c.l.b16 %v1359
    %v1665 = vunpack.c.h.b16 %v1359
    %v1666 = vunpack.c.l.b16 %v1360
    %v1667 = vunpack.c.h.b16 %v1360
    %v1668 = vunpack.c.l.b16 %v1361
    %v1669 = vunpack.c.h.b16 %v1361
    %v1670 = vunpack.c.l.b16 %v1362
    %v1671 = vunpack.c.h.b16 %v1362
    %v1672 = vunpack.c.l.b16 %v1363
    %v1673 = vunpack.c.h.b16 %v1363
    %v1674 = vunpack.c.l.b16 %v1364
    %v1675 = vunpack.c.h.b16 %v1364
    %v1676 = vunpack.c.l.b16 %v1365
    %v1677 = vunpack.c.h.b16 %v1365
    %v1678 = vunpack.c.l.b16 %v1366
    %v1679 = vunpack.c.h.b16 %v1366
    %v1680 = vunpack.c.l.b16 %v1367
    %v1681 = vunpack.c.h.b16 %v1367
    %v1682 = vunpack.c.l.b16 %v1368
    %v1683 = vunpack.c.h.b16 %v1368
    %v1684 = vunpack.c.l.b16 %v1369
    %v1685 = vunpack.c.h.b16 %v1369
    %v1686 = vunpack.c.l.b16 %v1370
    %v1687 = vunpack.c.h.b16 %v1370
    %v1688 = vunpack.c.l.b16 %v1371
    %v1689 = vunpack.c.h.b16 %v1371
    %v1690 = vunpack.c.l.b16 %v1372
    %v1691 = vunpack.c.h.b16 %v1372
    %v1692 = vunpack.c.l.b16 %v1373
    %v1693 = vunpack.c.h.b16 %v1373
    %v1694 = vunpack.c.l.b16 %v1374
    %v1695 = vunpack.c.h.b16 %v1374
    %v1696 = vunpack.c.l.b16 %v1375
    %v1697 = vunpack.c.h.b16 %v1375
    %v1698 = vunpack.c.l.b16 %v1376
    %v1699 = vunpack.c.h.b16 %v1376
    %v1700 = vunpack.c.l.b16 %v1377
    %v1701 = vunpack.c.h.b16 %v1377
    %v1702 = vunpack.c.l.b16 %v1378
    %v1703 = vunpack.c.h.b16 %v1378
    %v1704 = vunpack.c.l.b16 %v1379
    %v1705 = vunpack.c.h.b16 %v1379
    %v1706 = vunpack.c.l.b16 %v1380
    %v1707 = vunpack.c.h.b16 %v1380
    %v1708 = vunpack.c.l.b16 %v1381
    %v1709 = vunpack.c.h.b16 %v1381
    %v1710 = vunpack.c.l.b16 %v1382
    %v1711 = vunpack.c.h.b16 %v1382
    %v1712 = vunpack.c.l.b16 %v1383
    %v1713 = vunpack.c.h.b16 %v1383
    %v1714 = vunpack.c.l.b16 %v1384
    %v1715 = vunpack.c.h.b16 %v1384
    %v1716 = vpack.c.b16 %v1654, %v1652
    %v1717 = vpack.c.b16 %v1655, %v1653
    %v1718 = vpack.c.b16 %v1658, %v1656
    %v1719 = vpack.c.b16 %v1659, %v1657
    %v1720 = vpack.c.b16 %v1662, %v1660
    %v1721 = vpack.c.b16 %v1663, %v1661
    %v1722 = vpack.c.b16 %v1666, %v1664
    %v1723 = vpack.c.b16 %v1667, %v1665
    %v1724 = vpack.c.b16 %v1670, %v1668
    %v1725 = vpack.c.b16 %v1671, %v1669
    %v1726 = vpack.c.b16 %v1674, %v1672
    %v1727 = vpack.c.b16 %v1675, %v1673
    %v1728 = vpack.c.b16 %v1678, %v1676
    %v1729 = vpack.c.b16 %v1679, %v1677
    %v1730 = vpack.c.b16 %v1682, %v1680
    %v1731 = vpack.c.b16 %v1683, %v1681
    %v1732 = vpack.c.b16 %v1686, %v1684
    %v1733 = vpack.c.b16 %v1687, %v1685
    %v1734 = vpack.c.b16 %v1690, %v1688
    %v1735 = vpack.c.b16 %v1691, %v1689
    %v1736 = vpack.c.b16 %v1694, %v1692
    %v1737 = vpack.c.b16 %v1695, %v1693
    %v1738 = vpack.c.b16 %v1698, %v1696
    %v1739 = vpack.c.b16 %v1699, %v1697
    %v1740 = vpack.c.b16 %v1702, %v1700
    %v1741 = vpack.c.b16 %v1703, %v1701
    %v1742 = vpack.c.b16 %v1706, %v1704
    %v1743 = vpack.c.b16 %v1707, %v1705
    %v1744 = vpack.c.b16 %v1710, %v1708
    %v1745 = vpack.c.b16 %v1711, %v1709
    %v1746 = vpack.c.b16 %v1714, %v1712
    %v1747 = vpack.c.b16 %v1715, %v1713
    %1780 = vmatprep.subr.bf16.mxu0 %v1717
    %1781 = vmatpush1.bf16.msra.mxu0 %v1716
    %1782 = vmatprep.subr.bf16.mxu0 %v1719
    %1783 = vmatpush1.bf16.msra.mxu0 %v1718
    %1784 = vmatprep.subr.bf16.mxu0 %v1721
    %1785 = vmatpush1.bf16.msra.mxu0 %v1720
    %1786 = vmatprep.subr.bf16.mxu0 %v1723
    %1787 = vmatpush1.bf16.msra.mxu0 %v1722
    %1788 = vmatprep.subr.bf16.mxu0 %v1725
    %1789 = vmatpush1.bf16.msra.mxu0 %v1724
    %1790 = vmatprep.subr.bf16.mxu0 %v1727
    %1791 = vmatpush1.bf16.msra.mxu0 %v1726
    %1792 = vmatprep.subr.bf16.mxu0 %v1729
    %1793 = vmatpush1.bf16.msra.mxu0 %v1728
    %1794 = vmatprep.subr.bf16.mxu0 %v1731
    %1795 = vmatpush1.bf16.msra.mxu0 %v1730
    %1796 = vmatprep.subr.bf16.mxu0 %v1733
    %1797 = vmatpush1.bf16.msra.mxu0 %v1732
    %1798 = vmatprep.subr.bf16.mxu0 %v1735
    %1799 = vmatpush1.bf16.msra.mxu0 %v1734
    %1800 = vmatprep.subr.bf16.mxu0 %v1737
    %1801 = vmatpush1.bf16.msra.mxu0 %v1736
    %1802 = vmatprep.subr.bf16.mxu0 %v1739
    %1803 = vmatpush1.bf16.msra.mxu0 %v1738
    %1804 = vmatprep.subr.bf16.mxu0 %v1741
    %1805 = vmatpush1.bf16.msra.mxu0 %v1740
    %1806 = vmatprep.subr.bf16.mxu0 %v1743
    %1807 = vmatpush1.bf16.msra.mxu0 %v1742
    %1808 = vmatprep.subr.bf16.mxu0 %v1745
    %1809 = vmatpush1.bf16.msra.mxu0 %v1744
    %1810 = vmatprep.subr.bf16.mxu0 %v1747
    %1811 = vmatpush1.bf16.msra.mxu0 %v1746
    %1812 = vmatprep.mubr.bf16.mxu0 %v765
    %1813 = vmatmul.mubr.bf16.gmra.mrb[0].mxu0 %v764
    %v1814 = vpop.f32.mrb[0].mxu0
    %v1815 = vadd.f32 %v1612, %v1814
    %v1816 = vpop.f32.mrb[0].mxu0
    %v1817 = vadd.f32 %v1614, %v1816
    %v1818 = vpop.f32.mrb[0].mxu0
    %v1819 = vadd.f32 %v1616, %v1818
    %v1820 = vpop.f32.mrb[0].mxu0
    %v1821 = vadd.f32 %v1618, %v1820
    %1822 = vdwg.mxu0
    %s1823 = scalar_lea.vmem [#allocation16], 6
    %v1824 = vld [vmem:[%s1823] ss:$8 sm:$0x3]
    %v1826 = vlaneseq
    %v1827 = vshrl.u32 %v1826, 7
    %v1828 = vsub.s32 0, %v1827
    %v1829 = vrot.slane %v1824, %v1828
    %v1830 = vlaneseq
    %v1831 = vshrl.u32 %v1830, 7
    %v1832 = vsub.s32 1, %v1831
    %v1833 = vrot.slane %v1824, %v1832
    %v1836 = vadd.f32 %v1815, %v1829
    %v1837 = vadd.f32 %v1817, %v1833
    %v1838 = vadd.f32 %v1819, %v1829
    %v1839 = vadd.f32 %v1821, %v1833
    %s1840 = scalar_lea.vmem [#allocation16], 7
    %v1841 = vld [vmem:[%s1840] ss:$8 sm:$0x3]
    %s1842 = scalar_lea.vmem [#allocation16], 16
    %v1843 = vld [vmem:[%s1842] ss:$8 sm:$0x3]
    %v1844 = vadd.f32 %v1836, %v1837
    %1845 = vadd.xlane.f32.xlu0 %v1844
    %v1846 = vpop.xlane.xlu0 %1845
    %v1847 = vadd.f32 %v1838, %v1839
    %1848 = vadd.xlane.f32.xlu0 %v1847
    %v1849 = vpop.xlane.xlu0 %1848
    %v1850 = vmul.f32 %v1836, %v1836
    %v1851 = vmul.f32 %v1837, %v1837
    %v1852 = vmul.f32 %v1838, %v1838
    %v1853 = vmul.f32 %v1839, %v1839
    %v1854 = vadd.f32 %v1850, %v1851
    %1855 = vadd.xlane.f32.xlu0 %v1854
    %v1856 = vpop.xlane.xlu0 %1855
    %v1857 = vadd.f32 %v1852, %v1853
    %1858 = vadd.xlane.f32.xlu0 %v1857
    %v1859 = vpop.xlane.xlu0 %1858
    %v1860 = vmul.f32 %v1846, 0.00390625
    %v1861 = vmul.f32 %v1849, 0.00390625
    %v1862 = vmul.f32 %v1856, 0.00390625
    %v1863 = vmul.f32 %v1859, 0.00390625
    %v1864 = vmul.f32 %v1860, %v1860
    %v1865 = vmul.f32 %v1861, %v1861
    %v1866 = vsub.f32 %v1862, %v1864
    %v1867 = vsub.f32 %v1863, %v1865
    %v1868 = vmax.f32 %v1866, 0.0
    %v1869 = vmax.f32 %v1867, 0.0
    %v1870 = vadd.f32 %v1868, 1e-05
    %v1871 = vadd.f32 %v1869, 1e-05
    %v1872 = vrsqrt.pop %v1870
    %v1873 = vrsqrt.pop %v1871
    %v1874 = vsub.f32 %v1836, %v1860
    %v1875 = vsub.f32 %v1837, %v1860
    %v1876 = vsub.f32 %v1838, %v1861
    %v1877 = vsub.f32 %v1839, %v1861
    %v1878 = vmul.f32 %v1874, %v1872
    %v1879 = vmul.f32 %v1875, %v1872
    %v1880 = vmul.f32 %v1876, %v1873
    %v1881 = vmul.f32 %v1877, %v1873
    %v1882 = vpack.c.bf16 %v1880, %v1878
    %v1883 = vpack.c.bf16 %v1881, %v1879
    %v1885 = vlaneseq
    %v1886 = vshrl.u32 %v1885, 7
    %v1887 = vsub.s32 0, %v1886
    %v1888 = vrot.slane %v1841, %v1887
    %v1889 = vlaneseq
    %v1890 = vshrl.u32 %v1889, 7
    %v1891 = vsub.s32 1, %v1890
    %v1892 = vrot.slane %v1841, %v1891
    %v1895 = vpack.c.bf16 %v1888, %v1888
    %v1896 = vpack.c.bf16 %v1892, %v1892
    %v1898 = vpack.i.b16 %v1895, %v1895
    %v1900 = vlaneseq
    %v1901 = vshrl.u32 %v1900, 7
    %v1902 = vsub.s32 0, %v1901
    %v1903 = vrot.slane %v1898, %v1902
    %v1905 = vpack.i.b16 %v1896, %v1896
    %v1907 = vlaneseq
    %v1908 = vshrl.u32 %v1907, 7
    %v1909 = vsub.s32 0, %v1908
    %v1910 = vrot.slane %v1905, %v1909
    %v1911 = vmul.bf16 %v1882, %v1903
    %v1912 = vmul.bf16 %v1883, %v1910
    %v1914 = vlaneseq
    %v1915 = vshrl.u32 %v1914, 7
    %v1916 = vsub.s32 0, %v1915
    %v1917 = vrot.slane %v1843, %v1916
    %v1918 = vlaneseq
    %v1919 = vshrl.u32 %v1918, 7
    %v1920 = vsub.s32 1, %v1919
    %v1921 = vrot.slane %v1843, %v1920
    %v1924 = vpack.c.bf16 %v1917, %v1917
    %v1925 = vpack.c.bf16 %v1921, %v1921
    %v1927 = vpack.i.b16 %v1924, %v1924
    %v1929 = vlaneseq
    %v1930 = vshrl.u32 %v1929, 7
    %v1931 = vsub.s32 0, %v1930
    %v1932 = vrot.slane %v1927, %v1931
    %v1934 = vpack.i.b16 %v1925, %v1925
    %v1936 = vlaneseq
    %v1937 = vshrl.u32 %v1936, 7
    %v1938 = vsub.s32 0, %v1937
    %v1939 = vrot.slane %v1934, %v1938
    %v1940 = vadd.bf16 %v1911, %v1932
    %v1941 = vadd.bf16 %v1912, %v1939
    %v1942 = vmax.bf16 %v1940, 0
    %v1943 = vmax.bf16 %v1941, 0
    %v1944 = vld [vmem:[#allocation13] sm:$0xf]
    %v1945 = vld [vmem:[#allocation13 + $0x4] sm:$0xf]
    %v1946 = vld [vmem:[#allocation13 + $0x8] sm:$0xf]
    %v1947 = vld [vmem:[#allocation13 + $0xc] sm:$0xf]
    %v1948 = vld [vmem:[#allocation13 + $0x10] sm:$0xf]
    %v1949 = vld [vmem:[#allocation13 + $0x14] sm:$0xf]
    %v1950 = vld [vmem:[#allocation13 + $0x18] sm:$0xf]
    %v1951 = vld [vmem:[#allocation13 + $0x1c] sm:$0xf]
    %v1952 = vld [vmem:[#allocation13 + $0x20] sm:$0xf]
    %v1953 = vld [vmem:[#allocation13 + $0x24] sm:$0xf]
    %v1954 = vld [vmem:[#allocation13 + $0x28] sm:$0xf]
    %v1955 = vld [vmem:[#allocation13 + $0x2c] sm:$0xf]
    %v1956 = vld [vmem:[#allocation13 + $0x30] sm:$0xf]
    %v1957 = vld [vmem:[#allocation13 + $0x34] sm:$0xf]
    %v1958 = vld [vmem:[#allocation13 + $0x38] sm:$0xf]
    %v1959 = vld [vmem:[#allocation13 + $0x3c] sm:$0xf]
    %v1960 = vld [vmem:[#allocation13 + $0x40] sm:$0xf]
    %v1961 = vld [vmem:[#allocation13 + $0x44] sm:$0xf]
    %v1962 = vld [vmem:[#allocation13 + $0x48] sm:$0xf]
    %v1963 = vld [vmem:[#allocation13 + $0x4c] sm:$0xf]
    %v1964 = vld [vmem:[#allocation13 + $0x50] sm:$0xf]
    %v1965 = vld [vmem:[#allocation13 + $0x54] sm:$0xf]
    %v1966 = vld [vmem:[#allocation13 + $0x58] sm:$0xf]
    %v1967 = vld [vmem:[#allocation13 + $0x5c] sm:$0xf]
    %v1968 = vld [vmem:[#allocation13 + $0x60] sm:$0xf]
    %v1969 = vld [vmem:[#allocation13 + $0x64] sm:$0xf]
    %v1970 = vld [vmem:[#allocation13 + $0x68] sm:$0xf]
    %v1971 = vld [vmem:[#allocation13 + $0x6c] sm:$0xf]
    %v1972 = vld [vmem:[#allocation13 + $0x70] sm:$0xf]
    %v1973 = vld [vmem:[#allocation13 + $0x74] sm:$0xf]
    %v1974 = vld [vmem:[#allocation13 + $0x78] sm:$0xf]
    %v1975 = vld [vmem:[#allocation13 + $0x7c] sm:$0xf]
    %v1976 = vld [vmem:[#allocation16 + $0x11] ss:$0 sm:$0xff]
    %v2009 = vunpack.c.l.b16 %v1944
    %v2010 = vunpack.c.l.b16 %v1945
    %v2011 = vunpack.c.l.b16 %v1946
    %v2012 = vunpack.c.l.b16 %v1947
    %v2013 = vunpack.c.l.b16 %v1948
    %v2014 = vunpack.c.l.b16 %v1949
    %v2015 = vunpack.c.l.b16 %v1950
    %v2016 = vunpack.c.l.b16 %v1951
    %v2017 = vunpack.c.l.b16 %v1952
    %v2018 = vunpack.c.l.b16 %v1953
    %v2019 = vunpack.c.l.b16 %v1954
    %v2020 = vunpack.c.l.b16 %v1955
    %v2021 = vunpack.c.l.b16 %v1956
    %v2022 = vunpack.c.l.b16 %v1957
    %v2023 = vunpack.c.l.b16 %v1958
    %v2024 = vunpack.c.l.b16 %v1959
    %v2025 = vunpack.c.l.b16 %v1960
    %v2026 = vunpack.c.l.b16 %v1961
    %v2027 = vunpack.c.l.b16 %v1962
    %v2028 = vunpack.c.l.b16 %v1963
    %v2029 = vunpack.c.l.b16 %v1964
    %v2030 = vunpack.c.l.b16 %v1965
    %v2031 = vunpack.c.l.b16 %v1966
    %v2032 = vunpack.c.l.b16 %v1967
    %v2033 = vunpack.c.l.b16 %v1968
    %v2034 = vunpack.c.l.b16 %v1969
    %v2035 = vunpack.c.l.b16 %v1970
    %v2036 = vunpack.c.l.b16 %v1971
    %v2037 = vunpack.c.l.b16 %v1972
    %v2038 = vunpack.c.l.b16 %v1973
    %v2039 = vunpack.c.l.b16 %v1974
    %v2040 = vunpack.c.l.b16 %v1975
    %v2041 = vpack.c.b16 %v2010, %v2009
    %v2042 = vpack.c.b16 %v2012, %v2011
    %v2043 = vpack.c.b16 %v2014, %v2013
    %v2044 = vpack.c.b16 %v2016, %v2015
    %v2045 = vpack.c.b16 %v2018, %v2017
    %v2046 = vpack.c.b16 %v2020, %v2019
    %v2047 = vpack.c.b16 %v2022, %v2021
    %v2048 = vpack.c.b16 %v2024, %v2023
    %v2049 = vpack.c.b16 %v2026, %v2025
    %v2050 = vpack.c.b16 %v2028, %v2027
    %v2051 = vpack.c.b16 %v2030, %v2029
    %v2052 = vpack.c.b16 %v2032, %v2031
    %v2053 = vpack.c.b16 %v2034, %v2033
    %v2054 = vpack.c.b16 %v2036, %v2035
    %v2055 = vpack.c.b16 %v2038, %v2037
    %v2056 = vpack.c.b16 %v2040, %v2039
    %2073 = vmatprep.subr.bf16.mxu0 0
    %2074 = vmatpush1.bf16.msra.mxu0 %v2041
    %2075 = vmatprep.subr.bf16.mxu0 0
    %2076 = vmatpush1.bf16.msra.mxu0 %v2042
    %2077 = vmatprep.subr.bf16.mxu0 0
    %2078 = vmatpush1.bf16.msra.mxu0 %v2043
    %2079 = vmatprep.subr.bf16.mxu0 0
    %2080 = vmatpush1.bf16.msra.mxu0 %v2044
    %2081 = vmatprep.subr.bf16.mxu0 0
    %2082 = vmatpush1.bf16.msra.mxu0 %v2045
    %2083 = vmatprep.subr.bf16.mxu0 0
    %2084 = vmatpush1.bf16.msra.mxu0 %v2046
    %2085 = vmatprep.subr.bf16.mxu0 0
    %2086 = vmatpush1.bf16.msra.mxu0 %v2047
    %2087 = vmatprep.subr.bf16.mxu0 0
    %2088 = vmatpush1.bf16.msra.mxu0 %v2048
    %2089 = vmatprep.subr.bf16.mxu0 0
    %2090 = vmatpush1.bf16.msra.mxu0 %v2049
    %2091 = vmatprep.subr.bf16.mxu0 0
    %2092 = vmatpush1.bf16.msra.mxu0 %v2050
    %2093 = vmatprep.subr.bf16.mxu0 0
    %2094 = vmatpush1.bf16.msra.mxu0 %v2051
    %2095 = vmatprep.subr.bf16.mxu0 0
    %2096 = vmatpush1.bf16.msra.mxu0 %v2052
    %2097 = vmatprep.subr.bf16.mxu0 0
    %2098 = vmatpush1.bf16.msra.mxu0 %v2053
    %2099 = vmatprep.subr.bf16.mxu0 0
    %2100 = vmatpush1.bf16.msra.mxu0 %v2054
    %2101 = vmatprep.subr.bf16.mxu0 0
    %2102 = vmatpush1.bf16.msra.mxu0 %v2055
    %2103 = vmatprep.subr.bf16.mxu0 0
    %2104 = vmatpush1.bf16.msra.mxu0 %v2056
    %2105 = vmatprep.mubr.bf16.mxu0 %v1943
    %2106 = vmatmul.mubr.bf16.gmra.mrb[0].mxu0 %v1942
    %v2107 = vpop.f32.mrb[0].mxu0
    %v2108 = vadd.f32 %v1976, %v2107
    %v2109 = vpop.f32.mrb[0].mxu0
    %v2110 = vpop.f32.mrb[0].mxu0
    %v2111 = vadd.f32 %v1976, %v2110
    %v2112 = vpop.f32.mrb[0].mxu0
    %2113 = vdwg.mxu0
    %v2114 = vld [vmem:[#allocation16 + $0x12] ss:$0 sm:$0xff]
    %v2115 = vld [vmem:[#allocation16 + $0x13] ss:$0 sm:$0xff]
    %2116 = vadd.xlane.f32.xlu0 %v2108
    %v2117 = vpop.xlane.xlu0 %2116
    %2118 = vadd.xlane.f32.xlu0 %v2111
    %v2119 = vpop.xlane.xlu0 %2118
    %v2120 = vmul.f32 %v2108, %v2108
    %v2121 = vmul.f32 %v2111, %v2111
    %2122 = vadd.xlane.f32.xlu0 %v2120
    %v2123 = vpop.xlane.xlu0 %2122
    %2124 = vadd.xlane.f32.xlu0 %v2121
    %v2125 = vpop.xlane.xlu0 %2124
    %v2126 = vmul.f32 %v2117, 0.0078125
    %v2127 = vmul.f32 %v2119, 0.0078125
    %v2128 = vmul.f32 %v2123, 0.0078125
    %v2129 = vmul.f32 %v2125, 0.0078125
    %v2130 = vmul.f32 %v2126, %v2126
    %v2131 = vmul.f32 %v2127, %v2127
    %v2132 = vsub.f32 %v2128, %v2130
    %v2133 = vsub.f32 %v2129, %v2131
    %v2134 = vmax.f32 %v2132, 0.0
    %v2135 = vmax.f32 %v2133, 0.0
    %v2136 = vadd.f32 %v2134, 1e-05
    %v2137 = vadd.f32 %v2135, 1e-05
    %v2138 = vrsqrt.pop %v2136
    %v2139 = vrsqrt.pop %v2137
    %v2140 = vsub.f32 %v2108, %v2126
    %v2141 = vsub.f32 %v2111, %v2127
    %v2142 = vmul.f32 %v2140, %v2138
    %v2143 = vmul.f32 %v2141, %v2139
    %v2144 = vpack.c.bf16 %v2143, %v2142
    %v2145 = vpack.c.bf16 %v2114, %v2114
    %v2146 = vmul.bf16 %v2144, %v2145
    %v2147 = vpack.c.bf16 %v2115, %v2115
    %v2148 = vadd.bf16 %v2146, %v2147
    %v2149 = vmax.bf16 %v2148, 0
    %v2150 = vld [vmem:[#allocation14] sm:$0xf]
    %v2151 = vld [vmem:[#allocation14 + $0x4] sm:$0xf]
    %v2152 = vld [vmem:[#allocation14 + $0x8] sm:$0xf]
    %v2153 = vld [vmem:[#allocation14 + $0xc] sm:$0xf]
    %v2154 = vld [vmem:[#allocation14 + $0x10] sm:$0xf]
    %v2155 = vld [vmem:[#allocation14 + $0x14] sm:$0xf]
    %v2156 = vld [vmem:[#allocation14 + $0x18] sm:$0xf]
    %v2157 = vld [vmem:[#allocation14 + $0x1c] sm:$0xf]
    %v2158 = vld [vmem:[#allocation14 + $0x20] sm:$0xf]
    %v2159 = vld [vmem:[#allocation14 + $0x24] sm:$0xf]
    %v2160 = vld [vmem:[#allocation14 + $0x28] sm:$0xf]
    %v2161 = vld [vmem:[#allocation14 + $0x2c] sm:$0xf]
    %v2162 = vld [vmem:[#allocation14 + $0x30] sm:$0xf]
    %v2163 = vld [vmem:[#allocation14 + $0x34] sm:$0xf]
    %v2164 = vld [vmem:[#allocation14 + $0x38] sm:$0xf]
    %v2165 = vld [vmem:[#allocation14 + $0x3c] sm:$0xf]
    %v2166 = vld [vmem:[#allocation16 + $0x14] ss:$0 sm:$0xff]
    %v2183 = vunpack.c.l.b16 %v2150
    %v2184 = vunpack.c.l.b16 %v2151
    %v2185 = vunpack.c.l.b16 %v2152
    %v2186 = vunpack.c.l.b16 %v2153
    %v2187 = vunpack.c.l.b16 %v2154
    %v2188 = vunpack.c.l.b16 %v2155
    %v2189 = vunpack.c.l.b16 %v2156
    %v2190 = vunpack.c.l.b16 %v2157
    %v2191 = vunpack.c.l.b16 %v2158
    %v2192 = vunpack.c.l.b16 %v2159
    %v2193 = vunpack.c.l.b16 %v2160
    %v2194 = vunpack.c.l.b16 %v2161
    %v2195 = vunpack.c.l.b16 %v2162
    %v2196 = vunpack.c.l.b16 %v2163
    %v2197 = vunpack.c.l.b16 %v2164
    %v2198 = vunpack.c.l.b16 %v2165
    %v2199 = vpack.c.b16 %v2184, %v2183
    %v2200 = vpack.c.b16 %v2186, %v2185
    %v2201 = vpack.c.b16 %v2188, %v2187
    %v2202 = vpack.c.b16 %v2190, %v2189
    %v2203 = vpack.c.b16 %v2192, %v2191
    %v2204 = vpack.c.b16 %v2194, %v2193
    %v2205 = vpack.c.b16 %v2196, %v2195
    %v2206 = vpack.c.b16 %v2198, %v2197
    %2215 = vmatprep.subr.bf16.mxu0 0
    %2216 = vmatpush1.bf16.msra.mxu0 %v2199
    %2217 = vmatprep.subr.bf16.mxu0 0
    %2218 = vmatpush1.bf16.msra.mxu0 %v2200
    %2219 = vmatprep.subr.bf16.mxu0 0
    %2220 = vmatpush1.bf16.msra.mxu0 %v2201
    %2221 = vmatprep.subr.bf16.mxu0 0
    %2222 = vmatpush1.bf16.msra.mxu0 %v2202
    %2223 = vmatprep.subr.bf16.mxu0 0
    %2224 = vmatpush1.bf16.msra.mxu0 %v2203
    %2225 = vmatprep.subr.bf16.mxu0 0
    %2226 = vmatpush1.bf16.msra.mxu0 %v2204
    %2227 = vmatprep.subr.bf16.mxu0 0
    %2228 = vmatpush1.bf16.msra.mxu0 %v2205
    %2229 = vmatprep.subr.bf16.mxu0 0
    %2230 = vmatpush1.bf16.msra.mxu0 %v2206
    %2231 = vmatprep.subr.bf16.mxu0 0
    %2232 = vmatpush1.bf16.msra.mxu0 0
    %2233 = vmatprep.subr.bf16.mxu0 0
    %2234 = vmatpush1.bf16.msra.mxu0 0
    %2235 = vmatprep.subr.bf16.mxu0 0
    %2236 = vmatpush1.bf16.msra.mxu0 0
    %2237 = vmatprep.subr.bf16.mxu0 0
    %2238 = vmatpush1.bf16.msra.mxu0 0
    %2239 = vmatprep.subr.bf16.mxu0 0
    %2240 = vmatpush1.bf16.msra.mxu0 0
    %2241 = vmatprep.subr.bf16.mxu0 0
    %2242 = vmatpush1.bf16.msra.mxu0 0
    %2243 = vmatprep.subr.bf16.mxu0 0
    %2244 = vmatpush1.bf16.msra.mxu0 0
    %2245 = vmatprep.subr.bf16.mxu0 0
    %2246 = vmatpush1.bf16.msra.mxu0 0
    %2247 = vmatprep.mubr.bf16.mxu0 0
    %2248 = vmatmul.mubr.bf16.gmra.mrb[0].mxu0 %v2149
    %v2249 = vpop.f32.mrb[0].mxu0
    %v2250 = vadd.f32 %v2166, %v2249
    %v2251 = vpop.f32.mrb[0].mxu0
    %v2252 = vpop.f32.mrb[0].mxu0
    %v2253 = vadd.f32 %v2166, %v2252
    %v2254 = vpop.f32.mrb[0].mxu0
    %2255 = vdwg.mxu0
    %2256 = vst [vmem:[#allocation17] sm:$0xff] %v2250
    %2257 = vst [vmem:[#allocation17 + $0x8] sm:$0xff] %v2253
    // Predicated region
    $region74: #{multimodal_classifier_forward.1} parent=1 // pred_check
      _
    $region75: #{multimodal_classifier_forward.1} parent=1 // pred_check_branch
      %2259 = sbr.rel (0) target = $region77
    $region76: #{multimodal_classifier_forward.1} parent=1 // pred_region
      %s2261 = ssub.s32 256, 256
      %2262 = vsyncadd [#allocation4], %s2261
      %s2263 = sshll.u32 [#allocation17], 4
      %s2264 = int_to_ptr.vmem [resolvable:$true] %s2263
      %2269 = dma.vmem_to_hbm [thread:$0]  %s2264, 256, %s9, [#allocation4], 128, 128, 8
    $region77: #{multimodal_classifier_forward.1} parent=1 // pred_fallthru
      _
    // Predicated region
    $region78: #{multimodal_classifier_forward.1} parent=1 // pred_check
      _
    $region79: #{multimodal_classifier_forward.1} parent=1 // pred_check_branch
      %2271 = sbr.rel (0) target = $region81
    $region80: #{multimodal_classifier_forward.1} parent=1 // pred_region
      %2272 = dma.done [#allocation4], 256
    $region81: #{multimodal_classifier_forward.1} parent=1 // pred_fallthru
      _
    %2273 = vsyncpa [#allocation3], 1
    %2274 = vsyncpa [#allocation6], 1
    %2275 = vsyncpa [#allocation9], 1
    %2276 = vsyncpa [#allocation12], 1
    %2277 = vsyncpa [#allocation15], 1
    %2278 = vsyncpa [#allocation4], 1

</llo_original>
